<compile_context>
chip_gen: v7x
topology: tpu7x:2x2x1
jax: 0.10.0
libtpu: 0.0.40
codegen_flags: <defaults>
</compile_context>

<pallas_src>
import functools

import jax
import jax.numpy as jnp
from jax.experimental import pallas as pl
from jax.experimental.pallas import tpu as pltpu


def _sepconv_kernel(wdw_ref, wpw_ref, x_ref, out_ref, *scratch,
                    bt, c, kh, kw, sh, sw, ph, pw, hout, wout, unroll):
    # wdw_ref : SMEM (C*KH*KW,) f32   depthwise taps, flat C-major (torch layout)
    # wpw_ref : VMEM (Cout, C)        pointwise weights
    # x_ref   : VMEM (bt*C, H, W)     input tile (NCHW with N and C flattened)
    # out_ref : VMEM (bt, Cout, Hout*Wout) lane-dense output tile
    # scratch : [xpad (bt*C, Hp, Wp), dw (bt*C, Hout, Wout)]  when padded
    #           [dw (bt*C, Hout, Wout)]                       when not padded
    bc_total, h, w = x_ref.shape
    pad = (ph > 0) or (pw > 0)

    if pad:
        xpad_ref, dw_ref = scratch
        _, hp, wp = xpad_ref.shape
        zdt = xpad_ref.dtype
        # Zero only the border strips (not the whole buffer). Done every step
        # so the grid axis can stay "parallel" (scratch is per-core; an
        # init-once pl.when(program_id==0) would miss the second TensorCore).
        if ph > 0:
            xpad_ref[:, pl.ds(0, ph), :] = jnp.zeros((bc_total, ph, wp), zdt)
            xpad_ref[:, pl.ds(ph + h, ph), :] = jnp.zeros((bc_total, ph, wp), zdt)
        if pw > 0:
            xpad_ref[:, :, pl.ds(0, pw)] = jnp.zeros((bc_total, hp, pw), zdt)
            xpad_ref[:, :, pl.ds(pw + w, pw)] = jnp.zeros((bc_total, hp, pw), zdt)
        # Interior placement (single pass over the input tile).
        xpad_ref[:, pl.ds(ph, h), pl.ds(pw, w)] = x_ref[...]
        src = xpad_ref
    else:
        dw_ref, = scratch
        src = x_ref

    # ---- depthwise: per-channel scalar taps, f32 accumulation on the VPU ----
    row_sl = [pl.ds(i, hout) if sh == 1 else pl.ds(i, hout, stride=sh)
              for i in range(kh)]
    col_sl = [pl.ds(j, wout) if sw == 1 else pl.ds(j, wout, stride=sw)
              for j in range(kw)]
    ktaps = kh * kw

    def chan_body(bc, carry):
        base = (bc % c) * ktaps                      # torch (C, 1, KH, KW) layout
        acc = jnp.zeros((hout, wout), jnp.float32)
        for i in range(kh):                           # static: KH*KW taps only
            for j in range(kw):
                patch = src[bc, row_sl[i], col_sl[j]]        # ref-sliced tap load
                acc = acc + patch.astype(jnp.float32) * wdw_ref[base + i * kw + j]
        dw_ref[bc] = acc.astype(dw_ref.dtype)                # one full-slab store
        return carry

    jax.lax.fori_loop(0, bc_total, chan_body, 0, unroll=unroll)

    # ---- pointwise 1x1 conv: lane-dense MXU dot per image --------------------
    wpw = wpw_ref[...]                                        # (Cout, C)
    for b in range(bt):                                       # bt is small (capped)
        dw_b = dw_ref[pl.ds(b * c, c)].reshape(c, hout * wout)   # one bulk reshape
        out = jnp.dot(wpw, dw_b, preferred_element_type=jnp.float32)
        out_ref[b] = out.astype(out_ref.dtype)


def _device_budgets():
    """Returns (batch-tile VMEM budget, vmem_limit_bytes, force >=2 grid steps)."""
    try:
        kind = jax.devices()[0].device_kind.lower()
    except Exception:
        kind = ""
    if ("v7" in kind) or ("7x" in kind):
        # v7x: 64 MiB physical VMEM per TensorCore, 2 TCs per chip.
        return 16 << 20, 48 << 20, True
    # v5e / v6e: 128 MiB VMEM, single TensorCore -> fat tiles, no forced split.
    return 64 << 20, 100 << 20, False


def _pick_batch_tile(n, per_image_bytes, budget_bytes, force_multi_step, max_bt=32):
    """Images per grid step: as fat as the VMEM budget allows (amortizes the
    ~0.35us/step overhead), capped for code size, and split in >=2 steps only
    on chips with two TensorCores."""
    cap = max(1, int(budget_bytes // max(per_image_bytes, 1)))
    cap = min(cap, max_bt, n)
    if force_multi_step and n > 1:
        cap = min(cap, max(1, n // 2))
    for cand in range(cap, 0, -1):
        if n % cand == 0:
            return cand
    return 1


def separable_conv2d(x_nchw, w_dw, w_pw, *, stride, padding):
    """x_nchw: (N, C, H, W); w_dw: (C, 1, KH, KW); w_pw: (Cout, C, 1, 1)."""
    n, c, h, w = map(int, x_nchw.shape)
    kh, kw = int(w_dw.shape[2]), int(w_dw.shape[3])
    sh, sw = stride
    ph, pw = padding
    cout = int(w_pw.shape[0])

    hout = (h + 2 * ph - kh) // sh + 1
    wout = (w + 2 * pw - kw) // sw + 1
    hp, wp = h + 2 * ph, w + 2 * pw
    pad = (ph > 0) or (pw > 0)

    # bf16 activations keep the MXU dot native bf16; otherwise accumulate f32.
    dw_dtype = jnp.bfloat16 if x_nchw.dtype == jnp.bfloat16 else jnp.float32

    # Weight plumbing: free reshapes; depthwise taps cast to f32 on the host so
    # the in-kernel SMEM reads are plain f32 scalars.
    wdw_flat = w_dw.astype(jnp.float32).reshape(c * kh * kw)
    wpw_mat = w_pw.reshape(cout, c).astype(dw_dtype)

    # Per-image VMEM estimate: input/output blocks double-buffered by the
    # pipeline, padded-input and depthwise scratch single-buffered.
    bpe = jnp.dtype(x_nchw.dtype).itemsize
    dw_bpe = jnp.dtype(dw_dtype).itemsize
    per_image = (2 * c * h * w + 2 * cout * hout * wout) * bpe \
                + c * hout * wout * dw_bpe
    if pad:
        per_image += c * hp * wp * bpe

    budget, vmem_limit, force_multi = _device_budgets()
    bt = _pick_batch_tile(n, per_image, budget, force_multi)
    unroll = max(1, min(8, bt * c))

    kernel = functools.partial(
        _sepconv_kernel, bt=bt, c=c, kh=kh, kw=kw, sh=sh, sw=sw, ph=ph, pw=pw,
        hout=hout, wout=wout, unroll=unroll)

    if pad:
        scratch_shapes = [pltpu.VMEM((bt * c, hp, wp), x_nchw.dtype),
                          pltpu.VMEM((bt * c, hout, wout), dw_dtype)]
    else:
        scratch_shapes = [pltpu.VMEM((bt * c, hout, wout), dw_dtype)]

    x_flat = x_nchw.reshape(n * c, h, w)          # free metadata reshape (contiguous)

    out_flat = pl.pallas_call(
        kernel,
        out_shape=jax.ShapeDtypeStruct((n, cout, hout * wout), x_nchw.dtype),
        grid_spec=pltpu.PrefetchScalarGridSpec(
            num_scalar_prefetch=0,
            grid=(n // bt,),
            in_specs=[
                pl.BlockSpec(memory_space=pltpu.MemorySpace.SMEM),      # depthwise taps
                pl.BlockSpec((cout, c), lambda i: (0, 0)),              # pointwise weights
                pl.BlockSpec((bt * c, h, w), lambda i: (i, 0, 0)),      # input tile
            ],
            out_specs=pl.BlockSpec((bt, cout, hout * wout), lambda i: (i, 0, 0)),
            scratch_shapes=scratch_shapes,
        ),
        compiler_params=pltpu.CompilerParams(
            dimension_semantics=("parallel",),
            vmem_limit_bytes=vmem_limit,
        ),
    )(wdw_flat, wpw_mat, x_flat)

    return out_flat.reshape(n, cout, hout, wout)    # free reshape back to NCHW


if __name__ == "__main__":
    # SeparableConv2d(in=4, out=8, kernel=(3,3), stride=(1,1), padding=(1,1))
    N, C_IN, H, W = 2, 4, 16, 16
    C_OUT = 8
    KERNEL = (3, 3)
    STRIDE = (1, 1)
    PADDING = (1, 1)

    key = jax.random.PRNGKey(0)
    kx, kdw, kpw = jax.random.split(key, 3)
    x = jax.random.normal(kx, (N, C_IN, H, W), dtype=jnp.float32)
    # Deterministic synthetic parameters (shapes match torch's Conv2d weights).
    w_dw = jax.random.normal(kdw, (C_IN, 1, KERNEL[0], KERNEL[1]), dtype=jnp.float32) * 0.1
    w_pw = jax.random.normal(kpw, (C_OUT, C_IN, 1, 1), dtype=jnp.float32) * 0.1

    out = separable_conv2d(x, w_dw, w_pw, stride=STRIDE, padding=PADDING)
    out = jax.block_until_ready(out)

    # Reference (plain XLA convs, same semantics as the PyTorch module).
    ref = jax.lax.conv_general_dilated(
        x, w_dw, window_strides=STRIDE,
        padding=[(PADDING[0], PADDING[0]), (PADDING[1], PADDING[1])],
        feature_group_count=C_IN,
        dimension_numbers=("NCHW", "OIHW", "NCHW"))
    ref = jax.lax.conv_general_dilated(
        ref, w_pw, window_strides=(1, 1), padding="VALID",
        dimension_numbers=("NCHW", "OIHW", "NCHW"))

    assert out.shape == (N, C_OUT, H, W), out.shape
    assert jnp.allclose(out, ref, atol=1e-4, rtol=1e-4), float(jnp.max(jnp.abs(out - ref)))
    print("KERNEL_OK")
</pallas_src>

<mosaic_0001>
module attributes {stable_mosaic.version = 11 : i64} {
  func.func @_sepconv_kernel(%arg0: i32, %arg1: memref<36xf32, #tpu.memory_space<smem>>, %arg2: memref<8x4xf32, #tpu.memory_space<vmem>>, %arg3: memref<8x16x16xf32, #tpu.memory_space<vmem>>, %arg4: memref<2x8x256xf32, #tpu.memory_space<vmem>>, %arg5: memref<8x18x18xf32, #tpu.memory_space<vmem>>, %arg6: memref<8x16x16xf32, #tpu.memory_space<vmem>>) attributes {dimension_semantics = [#tpu.dimension_semantics<parallel>], iteration_bounds = array<i64: 1>, scalar_prefetch = 0 : i64, scratch_operands = 2 : i64, tpu.core_type = #tpu.core_type<tc>, window_params = [{transform_indices = @transform_0, window_bounds = array<i64: 36>}, {pipeline_mode = #tpu.pipeline_mode<synchronous>, transform_indices = @transform_1, window_bounds = array<i64: 8, 4>}, {transform_indices = @transform_2, window_bounds = array<i64: 8, 16, 16>}, {transform_indices = @transform_3, window_bounds = array<i64: 2, 8, 256>}]} {
    %cst = arith.constant 0.000000e+00 : f32
    %0 = vector.broadcast %cst : f32 to vector<8x1x18xf32>
    %c0 = arith.constant 0 : index
    %c0_0 = arith.constant 0 : index
    %c0_1 = arith.constant 0 : index
    %1 = vector.load %arg5[%c0, %c0_0, %c0_1] : memref<8x18x18xf32, #tpu.memory_space<vmem>>, vector<8x1x18xf32>
    tpu.vector_store %arg5[%c0, %c0_0, %c0_1], %0 {strides = array<i32>} : memref<8x18x18xf32, #tpu.memory_space<vmem>>, vector<8x1x18xf32>,
    %cst_2 = arith.constant 0.000000e+00 : f32
    %2 = vector.broadcast %cst_2 : f32 to vector<8x1x18xf32>
    %c0_3 = arith.constant 0 : index
    %c17 = arith.constant 17 : index
    %c0_4 = arith.constant 0 : index
    %3 = vector.load %arg5[%c0_3, %c17, %c0_4] : memref<8x18x18xf32, #tpu.memory_space<vmem>>, vector<8x1x18xf32>
    tpu.vector_store %arg5[%c0_3, %c17, %c0_4], %2 {strides = array<i32>} : memref<8x18x18xf32, #tpu.memory_space<vmem>>, vector<8x1x18xf32>,
    %cst_5 = arith.constant 0.000000e+00 : f32
    %4 = vector.broadcast %cst_5 : f32 to vector<8x18x1xf32>
    %c0_6 = arith.constant 0 : index
    %c0_7 = arith.constant 0 : index
    %c0_8 = arith.constant 0 : index
    %5 = vector.load %arg5[%c0_6, %c0_7, %c0_8] : memref<8x18x18xf32, #tpu.memory_space<vmem>>, vector<8x18x1xf32>
    tpu.vector_store %arg5[%c0_6, %c0_7, %c0_8], %4 {strides = array<i32>} : memref<8x18x18xf32, #tpu.memory_space<vmem>>, vector<8x18x1xf32>,
    %cst_9 = arith.constant 0.000000e+00 : f32
    %6 = vector.broadcast %cst_9 : f32 to vector<8x18x1xf32>
    %c0_10 = arith.constant 0 : index
    %c0_11 = arith.constant 0 : index
    %c17_12 = arith.constant 17 : index
    %7 = vector.load %arg5[%c0_10, %c0_11, %c17_12] : memref<8x18x18xf32, #tpu.memory_space<vmem>>, vector<8x18x1xf32>
    tpu.vector_store %arg5[%c0_10, %c0_11, %c17_12], %6 {strides = array<i32>} : memref<8x18x18xf32, #tpu.memory_space<vmem>>, vector<8x18x1xf32>,
    %c0_13 = arith.constant 0 : index
    %c0_14 = arith.constant 0 : index
    %c0_15 = arith.constant 0 : index
    %8 = vector.load %arg3[%c0_13, %c0_14, %c0_15] : memref<8x16x16xf32, #tpu.memory_space<vmem>>, vector<8x16x16xf32>
    %c0_16 = arith.constant 0 : index
    %c1 = arith.constant 1 : index
    %c1_17 = arith.constant 1 : index
    %9 = vector.load %arg5[%c0_16, %c1, %c1_17] : memref<8x18x18xf32, #tpu.memory_space<vmem>>, vector<8x16x16xf32>
    tpu.vector_store %arg5[%c0_16, %c1, %c1_17], %8 {strides = array<i32>} : memref<8x18x18xf32, #tpu.memory_space<vmem>>, vector<8x16x16xf32>,
    %c0_i32 = arith.constant 0 : i32
    %c4_i32 = arith.constant 4 : i32
    %c0_i32_18 = arith.constant 0 : i32
    %10 = arith.cmpi eq, %c4_i32, %c0_i32_18 : i32
    %c1_i32 = arith.constant 1 : i32
    %11 = arith.select %10, %c1_i32, %c4_i32 : i32
    %12 = arith.remsi %c0_i32, %11 : i32
    %c0_i32_19 = arith.constant 0 : i32
    %13 = arith.cmpi ne, %12, %c0_i32_19 : i32
    %c0_i32_20 = arith.constant 0 : i32
    %14 = arith.cmpi slt, %12, %c0_i32_20 : i32
    %c0_i32_21 = arith.constant 0 : i32
    %15 = arith.cmpi slt, %11, %c0_i32_21 : i32
    %16 = arith.xori %14, %15 : i1
    %17 = arith.andi %16, %13 : i1
    %18 = arith.addi %12, %11 : i32
    %19 = arith.select %17, %18, %12 : i32
    %c9_i32 = arith.constant 9 : i32
    %20 = arith.muli %19, %c9_i32 : i32
    %cst_22 = arith.constant 0.000000e+00 : f32
    %21 = vector.broadcast %cst_22 : f32 to vector<16x16xf32>
    %22 = arith.index_cast %c0_i32 : i32 to index
    %c0_23 = arith.constant 0 : index
    %c0_24 = arith.constant 0 : index
    %23 = vector.load %arg5[%22, %c0_23, %c0_24] : memref<8x18x18xf32, #tpu.memory_space<vmem>>, vector<1x16x16xf32>
    %24 = vector.shape_cast %23 : vector<1x16x16xf32> to vector<16x16xf32>
    %c0_i32_25 = arith.constant 0 : i32
    %25 = arith.addi %20, %c0_i32_25 : i32
    %c0_i32_26 = arith.constant 0 : i32
    %26 = arith.addi %25, %c0_i32_26 : i32
    %27 = arith.index_cast %26 : i32 to index
    %28 = memref.load %arg1[%27] : memref<36xf32, #tpu.memory_space<smem>>
    %29 = vector.broadcast %28 : f32 to vector<16x16xf32>
    %30 = arith.mulf %24, %29 : vector<16x16xf32>
    %31 = arith.addf %21, %30 : vector<16x16xf32>
    %32 = arith.index_cast %c0_i32 : i32 to index
    %c0_27 = arith.constant 0 : index
    %c1_28 = arith.constant 1 : index
    %33 = vector.load %arg5[%32, %c0_27, %c1_28] : memref<8x18x18xf32, #tpu.memory_space<vmem>>, vector<1x16x16xf32>
    %34 = vector.shape_cast %33 : vector<1x16x16xf32> to vector<16x16xf32>
    %c0_i32_29 = arith.constant 0 : i32
    %35 = arith.addi %20, %c0_i32_29 : i32
    %c1_i32_30 = arith.constant 1 : i32
    %36 = arith.addi %35, %c1_i32_30 : i32
    %37 = arith.index_cast %36 : i32 to index
    %38 = memref.load %arg1[%37] : memref<36xf32, #tpu.memory_space<smem>>
    %39 = vector.broadcast %38 : f32 to vector<16x16xf32>
    %40 = arith.mulf %34, %39 : vector<16x16xf32>
    %41 = arith.addf %31, %40 : vector<16x16xf32>
    %42 = arith.index_cast %c0_i32 : i32 to index
    %c0_31 = arith.constant 0 : index
    %c2 = arith.constant 2 : index
    %43 = vector.load %arg5[%42, %c0_31, %c2] : memref<8x18x18xf32, #tpu.memory_space<vmem>>, vector<1x16x16xf32>
    %44 = vector.shape_cast %43 : vector<1x16x16xf32> to vector<16x16xf32>
    %c0_i32_32 = arith.constant 0 : i32
    %45 = arith.addi %20, %c0_i32_32 : i32
    %c2_i32 = arith.constant 2 : i32
    %46 = arith.addi %45, %c2_i32 : i32
    %47 = arith.index_cast %46 : i32 to index
    %48 = memref.load %arg1[%47] : memref<36xf32, #tpu.memory_space<smem>>
    %49 = vector.broadcast %48 : f32 to vector<16x16xf32>
    %50 = arith.mulf %44, %49 : vector<16x16xf32>
    %51 = arith.addf %41, %50 : vector<16x16xf32>
    %52 = arith.index_cast %c0_i32 : i32 to index
    %c1_33 = arith.constant 1 : index
    %c0_34 = arith.constant 0 : index
    %53 = vector.load %arg5[%52, %c1_33, %c0_34] : memref<8x18x18xf32, #tpu.memory_space<vmem>>, vector<1x16x16xf32>
    %54 = vector.shape_cast %53 : vector<1x16x16xf32> to vector<16x16xf32>
    %c3_i32 = arith.constant 3 : i32
    %55 = arith.addi %20, %c3_i32 : i32
    %c0_i32_35 = arith.constant 0 : i32
    %56 = arith.addi %55, %c0_i32_35 : i32
    %57 = arith.index_cast %56 : i32 to index
    %58 = memref.load %arg1[%57] : memref<36xf32, #tpu.memory_space<smem>>
    %59 = vector.broadcast %58 : f32 to vector<16x16xf32>
    %60 = arith.mulf %54, %59 : vector<16x16xf32>
    %61 = arith.addf %51, %60 : vector<16x16xf32>
    %62 = arith.index_cast %c0_i32 : i32 to index
    %c1_36 = arith.constant 1 : index
    %c1_37 = arith.constant 1 : index
    %63 = vector.load %arg5[%62, %c1_36, %c1_37] : memref<8x18x18xf32, #tpu.memory_space<vmem>>, vector<1x16x16xf32>
    %64 = vector.shape_cast %63 : vector<1x16x16xf32> to vector<16x16xf32>
    %c3_i32_38 = arith.constant 3 : i32
    %65 = arith.addi %20, %c3_i32_38 : i32
    %c1_i32_39 = arith.constant 1 : i32
    %66 = arith.addi %65, %c1_i32_39 : i32
    %67 = arith.index_cast %66 : i32 to index
    %68 = memref.load %arg1[%67] : memref<36xf32, #tpu.memory_space<smem>>
    %69 = vector.broadcast %68 : f32 to vector<16x16xf32>
    %70 = arith.mulf %64, %69 : vector<16x16xf32>
    %71 = arith.addf %61, %70 : vector<16x16xf32>
    %72 = arith.index_cast %c0_i32 : i32 to index
    %c1_40 = arith.constant 1 : index
    %c2_41 = arith.constant 2 : index
    %73 = vector.load %arg5[%72, %c1_40, %c2_41] : memref<8x18x18xf32, #tpu.memory_space<vmem>>, vector<1x16x16xf32>
    %74 = vector.shape_cast %73 : vector<1x16x16xf32> to vector<16x16xf32>
    %c3_i32_42 = arith.constant 3 : i32
    %75 = arith.addi %20, %c3_i32_42 : i32
    %c2_i32_43 = arith.constant 2 : i32
    %76 = arith.addi %75, %c2_i32_43 : i32
    %77 = arith.index_cast %76 : i32 to index
    %78 = memref.load %arg1[%77] : memref<36xf32, #tpu.memory_space<smem>>
    %79 = vector.broadcast %78 : f32 to vector<16x16xf32>
    %80 = arith.mulf %74, %79 : vector<16x16xf32>
    %81 = arith.addf %71, %80 : vector<16x16xf32>
    %82 = arith.index_cast %c0_i32 : i32 to index
    %c2_44 = arith.constant 2 : index
    %c0_45 = arith.constant 0 : index
    %83 = vector.load %arg5[%82, %c2_44, %c0_45] : memref<8x18x18xf32, #tpu.memory_space<vmem>>, vector<1x16x16xf32>
    %84 = vector.shape_cast %83 : vector<1x16x16xf32> to vector<16x16xf32>
    %c6_i32 = arith.constant 6 : i32
    %85 = arith.addi %20, %c6_i32 : i32
    %c0_i32_46 = arith.constant 0 : i32
    %86 = arith.addi %85, %c0_i32_46 : i32
    %87 = arith.index_cast %86 : i32 to index
    %88 = memref.load %arg1[%87] : memref<36xf32, #tpu.memory_space<smem>>
    %89 = vector.broadcast %88 : f32 to vector<16x16xf32>
    %90 = arith.mulf %84, %89 : vector<16x16xf32>
    %91 = arith.addf %81, %90 : vector<16x16xf32>
    %92 = arith.index_cast %c0_i32 : i32 to index
    %c2_47 = arith.constant 2 : index
    %c1_48 = arith.constant 1 : index
    %93 = vector.load %arg5[%92, %c2_47, %c1_48] : memref<8x18x18xf32, #tpu.memory_space<vmem>>, vector<1x16x16xf32>
    %94 = vector.shape_cast %93 : vector<1x16x16xf32> to vector<16x16xf32>
    %c6_i32_49 = arith.constant 6 : i32
    %95 = arith.addi %20, %c6_i32_49 : i32
    %c1_i32_50 = arith.constant 1 : i32
    %96 = arith.addi %95, %c1_i32_50 : i32
    %97 = arith.index_cast %96 : i32 to index
    %98 = memref.load %arg1[%97] : memref<36xf32, #tpu.memory_space<smem>>
    %99 = vector.broadcast %98 : f32 to vector<16x16xf32>
    %100 = arith.mulf %94, %99 : vector<16x16xf32>
    %101 = arith.addf %91, %100 : vector<16x16xf32>
    %102 = arith.index_cast %c0_i32 : i32 to index
    %c2_51 = arith.constant 2 : index
    %c2_52 = arith.constant 2 : index
    %103 = vector.load %arg5[%102, %c2_51, %c2_52] : memref<8x18x18xf32, #tpu.memory_space<vmem>>, vector<1x16x16xf32>
    %104 = vector.shape_cast %103 : vector<1x16x16xf32> to vector<16x16xf32>
    %c6_i32_53 = arith.constant 6 : i32
    %105 = arith.addi %20, %c6_i32_53 : i32
    %c2_i32_54 = arith.constant 2 : i32
    %106 = arith.addi %105, %c2_i32_54 : i32
    %107 = arith.index_cast %106 : i32 to index
    %108 = memref.load %arg1[%107] : memref<36xf32, #tpu.memory_space<smem>>
    %109 = vector.broadcast %108 : f32 to vector<16x16xf32>
    %110 = arith.mulf %104, %109 : vector<16x16xf32>
    %111 = arith.addf %101, %110 : vector<16x16xf32>
    %112 = arith.index_cast %c0_i32 : i32 to index
    %c0_55 = arith.constant 0 : index
    %c0_56 = arith.constant 0 : index
    %113 = vector.load %arg6[%112, %c0_55, %c0_56] : memref<8x16x16xf32, #tpu.memory_space<vmem>>, vector<1x16x16xf32>
    %114 = vector.shape_cast %113 : vector<1x16x16xf32> to vector<16x16xf32>
    %115 = vector.shape_cast %111 : vector<16x16xf32> to vector<1x16x16xf32>
    tpu.vector_store %arg6[%112, %c0_55, %c0_56], %115 {strides = array<i32>} : memref<8x16x16xf32, #tpu.memory_space<vmem>>, vector<1x16x16xf32>,
    %c1_i32_57 = arith.constant 1 : i32
    %c4_i32_58 = arith.constant 4 : i32
    %c0_i32_59 = arith.constant 0 : i32
    %116 = arith.cmpi eq, %c4_i32_58, %c0_i32_59 : i32
    %c1_i32_60 = arith.constant 1 : i32
    %117 = arith.select %116, %c1_i32_60, %c4_i32_58 : i32
    %118 = arith.remsi %c1_i32_57, %117 : i32
    %c0_i32_61 = arith.constant 0 : i32
    %119 = arith.cmpi ne, %118, %c0_i32_61 : i32
    %c0_i32_62 = arith.constant 0 : i32
    %120 = arith.cmpi slt, %118, %c0_i32_62 : i32
    %c0_i32_63 = arith.constant 0 : i32
    %121 = arith.cmpi slt, %117, %c0_i32_63 : i32
    %122 = arith.xori %120, %121 : i1
    %123 = arith.andi %122, %119 : i1
    %124 = arith.addi %118, %117 : i32
    %125 = arith.select %123, %124, %118 : i32
    %c9_i32_64 = arith.constant 9 : i32
    %126 = arith.muli %125, %c9_i32_64 : i32
    %cst_65 = arith.constant 0.000000e+00 : f32
    %127 = vector.broadcast %cst_65 : f32 to vector<16x16xf32>
    %128 = arith.index_cast %c1_i32_57 : i32 to index
    %c0_66 = arith.constant 0 : index
    %c0_67 = arith.constant 0 : index
    %129 = vector.load %arg5[%128, %c0_66, %c0_67] : memref<8x18x18xf32, #tpu.memory_space<vmem>>, vector<1x16x16xf32>
    %130 = vector.shape_cast %129 : vector<1x16x16xf32> to vector<16x16xf32>
    %c0_i32_68 = arith.constant 0 : i32
    %131 = arith.addi %126, %c0_i32_68 : i32
    %c0_i32_69 = arith.constant 0 : i32
    %132 = arith.addi %131, %c0_i32_69 : i32
    %133 = arith.index_cast %132 : i32 to index
    %134 = memref.load %arg1[%133] : memref<36xf32, #tpu.memory_space<smem>>
    %135 = vector.broadcast %134 : f32 to vector<16x16xf32>
    %136 = arith.mulf %130, %135 : vector<16x16xf32>
    %137 = arith.addf %127, %136 : vector<16x16xf32>
    %138 = arith.index_cast %c1_i32_57 : i32 to index
    %c0_70 = arith.constant 0 : index
    %c1_71 = arith.constant 1 : index
    %139 = vector.load %arg5[%138, %c0_70, %c1_71] : memref<8x18x18xf32, #tpu.memory_space<vmem>>, vector<1x16x16xf32>
    %140 = vector.shape_cast %139 : vector<1x16x16xf32> to vector<16x16xf32>
    %c0_i32_72 = arith.constant 0 : i32
    %141 = arith.addi %126, %c0_i32_72 : i32
    %c1_i32_73 = arith.constant 1 : i32
    %142 = arith.addi %141, %c1_i32_73 : i32
    %143 = arith.index_cast %142 : i32 to index
    %144 = memref.load %arg1[%143] : memref<36xf32, #tpu.memory_space<smem>>
    %145 = vector.broadcast %144 : f32 to vector<16x16xf32>
    %146 = arith.mulf %140, %145 : vector<16x16xf32>
    %147 = arith.addf %137, %146 : vector<16x16xf32>
    %148 = arith.index_cast %c1_i32_57 : i32 to index
    %c0_74 = arith.constant 0 : index
    %c2_75 = arith.constant 2 : index
    %149 = vector.load %arg5[%148, %c0_74, %c2_75] : memref<8x18x18xf32, #tpu.memory_space<vmem>>, vector<1x16x16xf32>
    %150 = vector.shape_cast %149 : vector<1x16x16xf32> to vector<16x16xf32>
    %c0_i32_76 = arith.constant 0 : i32
    %151 = arith.addi %126, %c0_i32_76 : i32
    %c2_i32_77 = arith.constant 2 : i32
    %152 = arith.addi %151, %c2_i32_77 : i32
    %153 = arith.index_cast %152 : i32 to index
    %154 = memref.load %arg1[%153] : memref<36xf32, #tpu.memory_space<smem>>
    %155 = vector.broadcast %154 : f32 to vector<16x16xf32>
    %156 = arith.mulf %150, %155 : vector<16x16xf32>
    %157 = arith.addf %147, %156 : vector<16x16xf32>
    %158 = arith.index_cast %c1_i32_57 : i32 to index
    %c1_78 = arith.constant 1 : index
    %c0_79 = arith.constant 0 : index
    %159 = vector.load %arg5[%158, %c1_78, %c0_79] : memref<8x18x18xf32, #tpu.memory_space<vmem>>, vector<1x16x16xf32>
    %160 = vector.shape_cast %159 : vector<1x16x16xf32> to vector<16x16xf32>
    %c3_i32_80 = arith.constant 3 : i32
    %161 = arith.addi %126, %c3_i32_80 : i32
    %c0_i32_81 = arith.constant 0 : i32
    %162 = arith.addi %161, %c0_i32_81 : i32
    %163 = arith.index_cast %162 : i32 to index
    %164 = memref.load %arg1[%163] : memref<36xf32, #tpu.memory_space<smem>>
    %165 = vector.broadcast %164 : f32 to vector<16x16xf32>
    %166 = arith.mulf %160, %165 : vector<16x16xf32>
    %167 = arith.addf %157, %166 : vector<16x16xf32>
    %168 = arith.index_cast %c1_i32_57 : i32 to index
    %c1_82 = arith.constant 1 : index
    %c1_83 = arith.constant 1 : index
    %169 = vector.load %arg5[%168, %c1_82, %c1_83] : memref<8x18x18xf32, #tpu.memory_space<vmem>>, vector<1x16x16xf32>
    %170 = vector.shape_cast %169 : vector<1x16x16xf32> to vector<16x16xf32>
    %c3_i32_84 = arith.constant 3 : i32
    %171 = arith.addi %126, %c3_i32_84 : i32
    %c1_i32_85 = arith.constant 1 : i32
    %172 = arith.addi %171, %c1_i32_85 : i32
    %173 = arith.index_cast %172 : i32 to index
    %174 = memref.load %arg1[%173] : memref<36xf32, #tpu.memory_space<smem>>
    %175 = vector.broadcast %174 : f32 to vector<16x16xf32>
    %176 = arith.mulf %170, %175 : vector<16x16xf32>
    %177 = arith.addf %167, %176 : vector<16x16xf32>
    %178 = arith.index_cast %c1_i32_57 : i32 to index
    %c1_86 = arith.constant 1 : index
    %c2_87 = arith.constant 2 : index
    %179 = vector.load %arg5[%178, %c1_86, %c2_87] : memref<8x18x18xf32, #tpu.memory_space<vmem>>, vector<1x16x16xf32>
    %180 = vector.shape_cast %179 : vector<1x16x16xf32> to vector<16x16xf32>
    %c3_i32_88 = arith.constant 3 : i32
    %181 = arith.addi %126, %c3_i32_88 : i32
    %c2_i32_89 = arith.constant 2 : i32
    %182 = arith.addi %181, %c2_i32_89 : i32
    %183 = arith.index_cast %182 : i32 to index
    %184 = memref.load %arg1[%183] : memref<36xf32, #tpu.memory_space<smem>>
    %185 = vector.broadcast %184 : f32 to vector<16x16xf32>
    %186 = arith.mulf %180, %185 : vector<16x16xf32>
    %187 = arith.addf %177, %186 : vector<16x16xf32>
    %188 = arith.index_cast %c1_i32_57 : i32 to index
    %c2_90 = arith.constant 2 : index
    %c0_91 = arith.constant 0 : index
    %189 = vector.load %arg5[%188, %c2_90, %c0_91] : memref<8x18x18xf32, #tpu.memory_space<vmem>>, vector<1x16x16xf32>
    %190 = vector.shape_cast %189 : vector<1x16x16xf32> to vector<16x16xf32>
    %c6_i32_92 = arith.constant 6 : i32
    %191 = arith.addi %126, %c6_i32_92 : i32
    %c0_i32_93 = arith.constant 0 : i32
    %192 = arith.addi %191, %c0_i32_93 : i32
    %193 = arith.index_cast %192 : i32 to index
    %194 = memref.load %arg1[%193] : memref<36xf32, #tpu.memory_space<smem>>
    %195 = vector.broadcast %194 : f32 to vector<16x16xf32>
    %196 = arith.mulf %190, %195 : vector<16x16xf32>
    %197 = arith.addf %187, %196 : vector<16x16xf32>
    %198 = arith.index_cast %c1_i32_57 : i32 to index
    %c2_94 = arith.constant 2 : index
    %c1_95 = arith.constant 1 : index
    %199 = vector.load %arg5[%198, %c2_94, %c1_95] : memref<8x18x18xf32, #tpu.memory_space<vmem>>, vector<1x16x16xf32>
    %200 = vector.shape_cast %199 : vector<1x16x16xf32> to vector<16x16xf32>
    %c6_i32_96 = arith.constant 6 : i32
    %201 = arith.addi %126, %c6_i32_96 : i32
    %c1_i32_97 = arith.constant 1 : i32
    %202 = arith.addi %201, %c1_i32_97 : i32
    %203 = arith.index_cast %202 : i32 to index
    %204 = memref.load %arg1[%203] : memref<36xf32, #tpu.memory_space<smem>>
    %205 = vector.broadcast %204 : f32 to vector<16x16xf32>
    %206 = arith.mulf %200, %205 : vector<16x16xf32>
    %207 = arith.addf %197, %206 : vector<16x16xf32>
    %208 = arith.index_cast %c1_i32_57 : i32 to index
    %c2_98 = arith.constant 2 : index
    %c2_99 = arith.constant 2 : index
    %209 = vector.load %arg5[%208, %c2_98, %c2_99] : memref<8x18x18xf32, #tpu.memory_space<vmem>>, vector<1x16x16xf32>
    %210 = vector.shape_cast %209 : vector<1x16x16xf32> to vector<16x16xf32>
    %c6_i32_100 = arith.constant 6 : i32
    %211 = arith.addi %126, %c6_i32_100 : i32
    %c2_i32_101 = arith.constant 2 : i32
    %212 = arith.addi %211, %c2_i32_101 : i32
    %213 = arith.index_cast %212 : i32 to index
    %214 = memref.load %arg1[%213] : memref<36xf32, #tpu.memory_space<smem>>
    %215 = vector.broadcast %214 : f32 to vector<16x16xf32>
    %216 = arith.mulf %210, %215 : vector<16x16xf32>
    %217 = arith.addf %207, %216 : vector<16x16xf32>
    %218 = arith.index_cast %c1_i32_57 : i32 to index
    %c0_102 = arith.constant 0 : index
    %c0_103 = arith.constant 0 : index
    %219 = vector.load %arg6[%218, %c0_102, %c0_103] : memref<8x16x16xf32, #tpu.memory_space<vmem>>, vector<1x16x16xf32>
    %220 = vector.shape_cast %219 : vector<1x16x16xf32> to vector<16x16xf32>
    %221 = vector.shape_cast %217 : vector<16x16xf32> to vector<1x16x16xf32>
    tpu.vector_store %arg6[%218, %c0_102, %c0_103], %221 {strides = array<i32>} : memref<8x16x16xf32, #tpu.memory_space<vmem>>, vector<1x16x16xf32>,
    %c2_i32_104 = arith.constant 2 : i32
    %c4_i32_105 = arith.constant 4 : i32
    %c0_i32_106 = arith.constant 0 : i32
    %222 = arith.cmpi eq, %c4_i32_105, %c0_i32_106 : i32
    %c1_i32_107 = arith.constant 1 : i32
    %223 = arith.select %222, %c1_i32_107, %c4_i32_105 : i32
    %224 = arith.remsi %c2_i32_104, %223 : i32
    %c0_i32_108 = arith.constant 0 : i32
    %225 = arith.cmpi ne, %224, %c0_i32_108 : i32
    %c0_i32_109 = arith.constant 0 : i32
    %226 = arith.cmpi slt, %224, %c0_i32_109 : i32
    %c0_i32_110 = arith.constant 0 : i32
    %227 = arith.cmpi slt, %223, %c0_i32_110 : i32
    %228 = arith.xori %226, %227 : i1
    %229 = arith.andi %228, %225 : i1
    %230 = arith.addi %224, %223 : i32
    %231 = arith.select %229, %230, %224 : i32
    %c9_i32_111 = arith.constant 9 : i32
    %232 = arith.muli %231, %c9_i32_111 : i32
    %cst_112 = arith.constant 0.000000e+00 : f32
    %233 = vector.broadcast %cst_112 : f32 to vector<16x16xf32>
    %234 = arith.index_cast %c2_i32_104 : i32 to index
    %c0_113 = arith.constant 0 : index
    %c0_114 = arith.constant 0 : index
    %235 = vector.load %arg5[%234, %c0_113, %c0_114] : memref<8x18x18xf32, #tpu.memory_space<vmem>>, vector<1x16x16xf32>
    %236 = vector.shape_cast %235 : vector<1x16x16xf32> to vector<16x16xf32>
    %c0_i32_115 = arith.constant 0 : i32
    %237 = arith.addi %232, %c0_i32_115 : i32
    %c0_i32_116 = arith.constant 0 : i32
    %238 = arith.addi %237, %c0_i32_116 : i32
    %239 = arith.index_cast %238 : i32 to index
    %240 = memref.load %arg1[%239] : memref<36xf32, #tpu.memory_space<smem>>
    %241 = vector.broadcast %240 : f32 to vector<16x16xf32>
    %242 = arith.mulf %236, %241 : vector<16x16xf32>
    %243 = arith.addf %233, %242 : vector<16x16xf32>
    %244 = arith.index_cast %c2_i32_104 : i32 to index
    %c0_117 = arith.constant 0 : index
    %c1_118 = arith.constant 1 : index
    %245 = vector.load %arg5[%244, %c0_117, %c1_118] : memref<8x18x18xf32, #tpu.memory_space<vmem>>, vector<1x16x16xf32>
    %246 = vector.shape_cast %245 : vector<1x16x16xf32> to vector<16x16xf32>
    %c0_i32_119 = arith.constant 0 : i32
    %247 = arith.addi %232, %c0_i32_119 : i32
    %c1_i32_120 = arith.constant 1 : i32
    %248 = arith.addi %247, %c1_i32_120 : i32
    %249 = arith.index_cast %248 : i32 to index
    %250 = memref.load %arg1[%249] : memref<36xf32, #tpu.memory_space<smem>>
    %251 = vector.broadcast %250 : f32 to vector<16x16xf32>
    %252 = arith.mulf %246, %251 : vector<16x16xf32>
    %253 = arith.addf %243, %252 : vector<16x16xf32>
    %254 = arith.index_cast %c2_i32_104 : i32 to index
    %c0_121 = arith.constant 0 : index
    %c2_122 = arith.constant 2 : index
    %255 = vector.load %arg5[%254, %c0_121, %c2_122] : memref<8x18x18xf32, #tpu.memory_space<vmem>>, vector<1x16x16xf32>
    %256 = vector.shape_cast %255 : vector<1x16x16xf32> to vector<16x16xf32>
    %c0_i32_123 = arith.constant 0 : i32
    %257 = arith.addi %232, %c0_i32_123 : i32
    %c2_i32_124 = arith.constant 2 : i32
    %258 = arith.addi %257, %c2_i32_124 : i32
    %259 = arith.index_cast %258 : i32 to index
    %260 = memref.load %arg1[%259] : memref<36xf32, #tpu.memory_space<smem>>
    %261 = vector.broadcast %260 : f32 to vector<16x16xf32>
    %262 = arith.mulf %256, %261 : vector<16x16xf32>
    %263 = arith.addf %253, %262 : vector<16x16xf32>
    %264 = arith.index_cast %c2_i32_104 : i32 to index
    %c1_125 = arith.constant 1 : index
    %c0_126 = arith.constant 0 : index
    %265 = vector.load %arg5[%264, %c1_125, %c0_126] : memref<8x18x18xf32, #tpu.memory_space<vmem>>, vector<1x16x16xf32>
    %266 = vector.shape_cast %265 : vector<1x16x16xf32> to vector<16x16xf32>
    %c3_i32_127 = arith.constant 3 : i32
    %267 = arith.addi %232, %c3_i32_127 : i32
    %c0_i32_128 = arith.constant 0 : i32
    %268 = arith.addi %267, %c0_i32_128 : i32
    %269 = arith.index_cast %268 : i32 to index
    %270 = memref.load %arg1[%269] : memref<36xf32, #tpu.memory_space<smem>>
    %271 = vector.broadcast %270 : f32 to vector<16x16xf32>
    %272 = arith.mulf %266, %271 : vector<16x16xf32>
    %273 = arith.addf %263, %272 : vector<16x16xf32>
    %274 = arith.index_cast %c2_i32_104 : i32 to index
    %c1_129 = arith.constant 1 : index
    %c1_130 = arith.constant 1 : index
    %275 = vector.load %arg5[%274, %c1_129, %c1_130] : memref<8x18x18xf32, #tpu.memory_space<vmem>>, vector<1x16x16xf32>
    %276 = vector.shape_cast %275 : vector<1x16x16xf32> to vector<16x16xf32>
    %c3_i32_131 = arith.constant 3 : i32
    %277 = arith.addi %232, %c3_i32_131 : i32
    %c1_i32_132 = arith.constant 1 : i32
    %278 = arith.addi %277, %c1_i32_132 : i32
    %279 = arith.index_cast %278 : i32 to index
    %280 = memref.load %arg1[%279] : memref<36xf32, #tpu.memory_space<smem>>
    %281 = vector.broadcast %280 : f32 to vector<16x16xf32>
    %282 = arith.mulf %276, %281 : vector<16x16xf32>
    %283 = arith.addf %273, %282 : vector<16x16xf32>
    %284 = arith.index_cast %c2_i32_104 : i32 to index
    %c1_133 = arith.constant 1 : index
    %c2_134 = arith.constant 2 : index
    %285 = vector.load %arg5[%284, %c1_133, %c2_134] : memref<8x18x18xf32, #tpu.memory_space<vmem>>, vector<1x16x16xf32>
    %286 = vector.shape_cast %285 : vector<1x16x16xf32> to vector<16x16xf32>
    %c3_i32_135 = arith.constant 3 : i32
    %287 = arith.addi %232, %c3_i32_135 : i32
    %c2_i32_136 = arith.constant 2 : i32
    %288 = arith.addi %287, %c2_i32_136 : i32
    %289 = arith.index_cast %288 : i32 to index
    %290 = memref.load %arg1[%289] : memref<36xf32, #tpu.memory_space<smem>>
    %291 = vector.broadcast %290 : f32 to vector<16x16xf32>
    %292 = arith.mulf %286, %291 : vector<16x16xf32>
    %293 = arith.addf %283, %292 : vector<16x16xf32>
    %294 = arith.index_cast %c2_i32_104 : i32 to index
    %c2_137 = arith.constant 2 : index
    %c0_138 = arith.constant 0 : index
    %295 = vector.load %arg5[%294, %c2_137, %c0_138] : memref<8x18x18xf32, #tpu.memory_space<vmem>>, vector<1x16x16xf32>
    %296 = vector.shape_cast %295 : vector<1x16x16xf32> to vector<16x16xf32>
    %c6_i32_139 = arith.constant 6 : i32
    %297 = arith.addi %232, %c6_i32_139 : i32
    %c0_i32_140 = arith.constant 0 : i32
    %298 = arith.addi %297, %c0_i32_140 : i32
    %299 = arith.index_cast %298 : i32 to index
    %300 = memref.load %arg1[%299] : memref<36xf32, #tpu.memory_space<smem>>
    %301 = vector.broadcast %300 : f32 to vector<16x16xf32>
    %302 = arith.mulf %296, %301 : vector<16x16xf32>
    %303 = arith.addf %293, %302 : vector<16x16xf32>
    %304 = arith.index_cast %c2_i32_104 : i32 to index
    %c2_141 = arith.constant 2 : index
    %c1_142 = arith.constant 1 : index
    %305 = vector.load %arg5[%304, %c2_141, %c1_142] : memref<8x18x18xf32, #tpu.memory_space<vmem>>, vector<1x16x16xf32>
    %306 = vector.shape_cast %305 : vector<1x16x16xf32> to vector<16x16xf32>
    %c6_i32_143 = arith.constant 6 : i32
    %307 = arith.addi %232, %c6_i32_143 : i32
    %c1_i32_144 = arith.constant 1 : i32
    %308 = arith.addi %307, %c1_i32_144 : i32
    %309 = arith.index_cast %308 : i32 to index
    %310 = memref.load %arg1[%309] : memref<36xf32, #tpu.memory_space<smem>>
    %311 = vector.broadcast %310 : f32 to vector<16x16xf32>
    %312 = arith.mulf %306, %311 : vector<16x16xf32>
    %313 = arith.addf %303, %312 : vector<16x16xf32>
    %314 = arith.index_cast %c2_i32_104 : i32 to index
    %c2_145 = arith.constant 2 : index
    %c2_146 = arith.constant 2 : index
    %315 = vector.load %arg5[%314, %c2_145, %c2_146] : memref<8x18x18xf32, #tpu.memory_space<vmem>>, vector<1x16x16xf32>
    %316 = vector.shape_cast %315 : vector<1x16x16xf32> to vector<16x16xf32>
    %c6_i32_147 = arith.constant 6 : i32
    %317 = arith.addi %232, %c6_i32_147 : i32
    %c2_i32_148 = arith.constant 2 : i32
    %318 = arith.addi %317, %c2_i32_148 : i32
    %319 = arith.index_cast %318 : i32 to index
    %320 = memref.load %arg1[%319] : memref<36xf32, #tpu.memory_space<smem>>
    %321 = vector.broadcast %320 : f32 to vector<16x16xf32>
    %322 = arith.mulf %316, %321 : vector<16x16xf32>
    %323 = arith.addf %313, %322 : vector<16x16xf32>
    %324 = arith.index_cast %c2_i32_104 : i32 to index
    %c0_149 = arith.constant 0 : index
    %c0_150 = arith.constant 0 : index
    %325 = vector.load %arg6[%324, %c0_149, %c0_150] : memref<8x16x16xf32, #tpu.memory_space<vmem>>, vector<1x16x16xf32>
    %326 = vector.shape_cast %325 : vector<1x16x16xf32> to vector<16x16xf32>
    %327 = vector.shape_cast %323 : vector<16x16xf32> to vector<1x16x16xf32>
    tpu.vector_store %arg6[%324, %c0_149, %c0_150], %327 {strides = array<i32>} : memref<8x16x16xf32, #tpu.memory_space<vmem>>, vector<1x16x16xf32>,
    %c3_i32_151 = arith.constant 3 : i32
    %c4_i32_152 = arith.constant 4 : i32
    %c0_i32_153 = arith.constant 0 : i32
    %328 = arith.cmpi eq, %c4_i32_152, %c0_i32_153 : i32
    %c1_i32_154 = arith.constant 1 : i32
    %329 = arith.select %328, %c1_i32_154, %c4_i32_152 : i32
    %330 = arith.remsi %c3_i32_151, %329 : i32
    %c0_i32_155 = arith.constant 0 : i32
    %331 = arith.cmpi ne, %330, %c0_i32_155 : i32
    %c0_i32_156 = arith.constant 0 : i32
    %332 = arith.cmpi slt, %330, %c0_i32_156 : i32
    %c0_i32_157 = arith.constant 0 : i32
    %333 = arith.cmpi slt, %329, %c0_i32_157 : i32
    %334 = arith.xori %332, %333 : i1
    %335 = arith.andi %334, %331 : i1
    %336 = arith.addi %330, %329 : i32
    %337 = arith.select %335, %336, %330 : i32
    %c9_i32_158 = arith.constant 9 : i32
    %338 = arith.muli %337, %c9_i32_158 : i32
    %cst_159 = arith.constant 0.000000e+00 : f32
    %339 = vector.broadcast %cst_159 : f32 to vector<16x16xf32>
    %340 = arith.index_cast %c3_i32_151 : i32 to index
    %c0_160 = arith.constant 0 : index
    %c0_161 = arith.constant 0 : index
    %341 = vector.load %arg5[%340, %c0_160, %c0_161] : memref<8x18x18xf32, #tpu.memory_space<vmem>>, vector<1x16x16xf32>
    %342 = vector.shape_cast %341 : vector<1x16x16xf32> to vector<16x16xf32>
    %c0_i32_162 = arith.constant 0 : i32
    %343 = arith.addi %338, %c0_i32_162 : i32
    %c0_i32_163 = arith.constant 0 : i32
    %344 = arith.addi %343, %c0_i32_163 : i32
    %345 = arith.index_cast %344 : i32 to index
    %346 = memref.load %arg1[%345] : memref<36xf32, #tpu.memory_space<smem>>
    %347 = vector.broadcast %346 : f32 to vector<16x16xf32>
    %348 = arith.mulf %342, %347 : vector<16x16xf32>
    %349 = arith.addf %339, %348 : vector<16x16xf32>
    %350 = arith.index_cast %c3_i32_151 : i32 to index
    %c0_164 = arith.constant 0 : index
    %c1_165 = arith.constant 1 : index
    %351 = vector.load %arg5[%350, %c0_164, %c1_165] : memref<8x18x18xf32, #tpu.memory_space<vmem>>, vector<1x16x16xf32>
    %352 = vector.shape_cast %351 : vector<1x16x16xf32> to vector<16x16xf32>
    %c0_i32_166 = arith.constant 0 : i32
    %353 = arith.addi %338, %c0_i32_166 : i32
    %c1_i32_167 = arith.constant 1 : i32
    %354 = arith.addi %353, %c1_i32_167 : i32
    %355 = arith.index_cast %354 : i32 to index
    %356 = memref.load %arg1[%355] : memref<36xf32, #tpu.memory_space<smem>>
    %357 = vector.broadcast %356 : f32 to vector<16x16xf32>
    %358 = arith.mulf %352, %357 : vector<16x16xf32>
    %359 = arith.addf %349, %358 : vector<16x16xf32>
    %360 = arith.index_cast %c3_i32_151 : i32 to index
    %c0_168 = arith.constant 0 : index
    %c2_169 = arith.constant 2 : index
    %361 = vector.load %arg5[%360, %c0_168, %c2_169] : memref<8x18x18xf32, #tpu.memory_space<vmem>>, vector<1x16x16xf32>
    %362 = vector.shape_cast %361 : vector<1x16x16xf32> to vector<16x16xf32>
    %c0_i32_170 = arith.constant 0 : i32
    %363 = arith.addi %338, %c0_i32_170 : i32
    %c2_i32_171 = arith.constant 2 : i32
    %364 = arith.addi %363, %c2_i32_171 : i32
    %365 = arith.index_cast %364 : i32 to index
    %366 = memref.load %arg1[%365] : memref<36xf32, #tpu.memory_space<smem>>
    %367 = vector.broadcast %366 : f32 to vector<16x16xf32>
    %368 = arith.mulf %362, %367 : vector<16x16xf32>
    %369 = arith.addf %359, %368 : vector<16x16xf32>
    %370 = arith.index_cast %c3_i32_151 : i32 to index
    %c1_172 = arith.constant 1 : index
    %c0_173 = arith.constant 0 : index
    %371 = vector.load %arg5[%370, %c1_172, %c0_173] : memref<8x18x18xf32, #tpu.memory_space<vmem>>, vector<1x16x16xf32>
    %372 = vector.shape_cast %371 : vector<1x16x16xf32> to vector<16x16xf32>
    %c3_i32_174 = arith.constant 3 : i32
    %373 = arith.addi %338, %c3_i32_174 : i32
    %c0_i32_175 = arith.constant 0 : i32
    %374 = arith.addi %373, %c0_i32_175 : i32
    %375 = arith.index_cast %374 : i32 to index
    %376 = memref.load %arg1[%375] : memref<36xf32, #tpu.memory_space<smem>>
    %377 = vector.broadcast %376 : f32 to vector<16x16xf32>
    %378 = arith.mulf %372, %377 : vector<16x16xf32>
    %379 = arith.addf %369, %378 : vector<16x16xf32>
    %380 = arith.index_cast %c3_i32_151 : i32 to index
    %c1_176 = arith.constant 1 : index
    %c1_177 = arith.constant 1 : index
    %381 = vector.load %arg5[%380, %c1_176, %c1_177] : memref<8x18x18xf32, #tpu.memory_space<vmem>>, vector<1x16x16xf32>
    %382 = vector.shape_cast %381 : vector<1x16x16xf32> to vector<16x16xf32>
    %c3_i32_178 = arith.constant 3 : i32
    %383 = arith.addi %338, %c3_i32_178 : i32
    %c1_i32_179 = arith.constant 1 : i32
    %384 = arith.addi %383, %c1_i32_179 : i32
    %385 = arith.index_cast %384 : i32 to index
    %386 = memref.load %arg1[%385] : memref<36xf32, #tpu.memory_space<smem>>
    %387 = vector.broadcast %386 : f32 to vector<16x16xf32>
    %388 = arith.mulf %382, %387 : vector<16x16xf32>
    %389 = arith.addf %379, %388 : vector<16x16xf32>
    %390 = arith.index_cast %c3_i32_151 : i32 to index
    %c1_180 = arith.constant 1 : index
    %c2_181 = arith.constant 2 : index
    %391 = vector.load %arg5[%390, %c1_180, %c2_181] : memref<8x18x18xf32, #tpu.memory_space<vmem>>, vector<1x16x16xf32>
    %392 = vector.shape_cast %391 : vector<1x16x16xf32> to vector<16x16xf32>
    %c3_i32_182 = arith.constant 3 : i32
    %393 = arith.addi %338, %c3_i32_182 : i32
    %c2_i32_183 = arith.constant 2 : i32
    %394 = arith.addi %393, %c2_i32_183 : i32
    %395 = arith.index_cast %394 : i32 to index
    %396 = memref.load %arg1[%395] : memref<36xf32, #tpu.memory_space<smem>>
    %397 = vector.broadcast %396 : f32 to vector<16x16xf32>
    %398 = arith.mulf %392, %397 : vector<16x16xf32>
    %399 = arith.addf %389, %398 : vector<16x16xf32>
    %400 = arith.index_cast %c3_i32_151 : i32 to index
    %c2_184 = arith.constant 2 : index
    %c0_185 = arith.constant 0 : index
    %401 = vector.load %arg5[%400, %c2_184, %c0_185] : memref<8x18x18xf32, #tpu.memory_space<vmem>>, vector<1x16x16xf32>
    %402 = vector.shape_cast %401 : vector<1x16x16xf32> to vector<16x16xf32>
    %c6_i32_186 = arith.constant 6 : i32
    %403 = arith.addi %338, %c6_i32_186 : i32
    %c0_i32_187 = arith.constant 0 : i32
    %404 = arith.addi %403, %c0_i32_187 : i32
    %405 = arith.index_cast %404 : i32 to index
    %406 = memref.load %arg1[%405] : memref<36xf32, #tpu.memory_space<smem>>
    %407 = vector.broadcast %406 : f32 to vector<16x16xf32>
    %408 = arith.mulf %402, %407 : vector<16x16xf32>
    %409 = arith.addf %399, %408 : vector<16x16xf32>
    %410 = arith.index_cast %c3_i32_151 : i32 to index
    %c2_188 = arith.constant 2 : index
    %c1_189 = arith.constant 1 : index
    %411 = vector.load %arg5[%410, %c2_188, %c1_189] : memref<8x18x18xf32, #tpu.memory_space<vmem>>, vector<1x16x16xf32>
    %412 = vector.shape_cast %411 : vector<1x16x16xf32> to vector<16x16xf32>
    %c6_i32_190 = arith.constant 6 : i32
    %413 = arith.addi %338, %c6_i32_190 : i32
    %c1_i32_191 = arith.constant 1 : i32
    %414 = arith.addi %413, %c1_i32_191 : i32
    %415 = arith.index_cast %414 : i32 to index
    %416 = memref.load %arg1[%415] : memref<36xf32, #tpu.memory_space<smem>>
    %417 = vector.broadcast %416 : f32 to vector<16x16xf32>
    %418 = arith.mulf %412, %417 : vector<16x16xf32>
    %419 = arith.addf %409, %418 : vector<16x16xf32>
    %420 = arith.index_cast %c3_i32_151 : i32 to index
    %c2_192 = arith.constant 2 : index
    %c2_193 = arith.constant 2 : index
    %421 = vector.load %arg5[%420, %c2_192, %c2_193] : memref<8x18x18xf32, #tpu.memory_space<vmem>>, vector<1x16x16xf32>
    %422 = vector.shape_cast %421 : vector<1x16x16xf32> to vector<16x16xf32>
    %c6_i32_194 = arith.constant 6 : i32
    %423 = arith.addi %338, %c6_i32_194 : i32
    %c2_i32_195 = arith.constant 2 : i32
    %424 = arith.addi %423, %c2_i32_195 : i32
    %425 = arith.index_cast %424 : i32 to index
    %426 = memref.load %arg1[%425] : memref<36xf32, #tpu.memory_space<smem>>
    %427 = vector.broadcast %426 : f32 to vector<16x16xf32>
    %428 = arith.mulf %422, %427 : vector<16x16xf32>
    %429 = arith.addf %419, %428 : vector<16x16xf32>
    %430 = arith.index_cast %c3_i32_151 : i32 to index
    %c0_196 = arith.constant 0 : index
    %c0_197 = arith.constant 0 : index
    %431 = vector.load %arg6[%430, %c0_196, %c0_197] : memref<8x16x16xf32, #tpu.memory_space<vmem>>, vector<1x16x16xf32>
    %432 = vector.shape_cast %431 : vector<1x16x16xf32> to vector<16x16xf32>
    %433 = vector.shape_cast %429 : vector<16x16xf32> to vector<1x16x16xf32>
    tpu.vector_store %arg6[%430, %c0_196, %c0_197], %433 {strides = array<i32>} : memref<8x16x16xf32, #tpu.memory_space<vmem>>, vector<1x16x16xf32>,
    %c4_i32_198 = arith.constant 4 : i32
    %c4_i32_199 = arith.constant 4 : i32
    %c0_i32_200 = arith.constant 0 : i32
    %434 = arith.cmpi eq, %c4_i32_199, %c0_i32_200 : i32
    %c1_i32_201 = arith.constant 1 : i32
    %435 = arith.select %434, %c1_i32_201, %c4_i32_199 : i32
    %436 = arith.remsi %c4_i32_198, %435 : i32
    %c0_i32_202 = arith.constant 0 : i32
    %437 = arith.cmpi ne, %436, %c0_i32_202 : i32
    %c0_i32_203 = arith.constant 0 : i32
    %438 = arith.cmpi slt, %436, %c0_i32_203 : i32
    %c0_i32_204 = arith.constant 0 : i32
    %439 = arith.cmpi slt, %435, %c0_i32_204 : i32
    %440 = arith.xori %438, %439 : i1
    %441 = arith.andi %440, %437 : i1
    %442 = arith.addi %436, %435 : i32
    %443 = arith.select %441, %442, %436 : i32
    %c9_i32_205 = arith.constant 9 : i32
    %444 = arith.muli %443, %c9_i32_205 : i32
    %cst_206 = arith.constant 0.000000e+00 : f32
    %445 = vector.broadcast %cst_206 : f32 to vector<16x16xf32>
    %446 = arith.index_cast %c4_i32_198 : i32 to index
    %c0_207 = arith.constant 0 : index
    %c0_208 = arith.constant 0 : index
    %447 = vector.load %arg5[%446, %c0_207, %c0_208] : memref<8x18x18xf32, #tpu.memory_space<vmem>>, vector<1x16x16xf32>
    %448 = vector.shape_cast %447 : vector<1x16x16xf32> to vector<16x16xf32>
    %c0_i32_209 = arith.constant 0 : i32
    %449 = arith.addi %444, %c0_i32_209 : i32
    %c0_i32_210 = arith.constant 0 : i32
    %450 = arith.addi %449, %c0_i32_210 : i32
    %451 = arith.index_cast %450 : i32 to index
    %452 = memref.load %arg1[%451] : memref<36xf32, #tpu.memory_space<smem>>
    %453 = vector.broadcast %452 : f32 to vector<16x16xf32>
    %454 = arith.mulf %448, %453 : vector<16x16xf32>
    %455 = arith.addf %445, %454 : vector<16x16xf32>
    %456 = arith.index_cast %c4_i32_198 : i32 to index
    %c0_211 = arith.constant 0 : index
    %c1_212 = arith.constant 1 : index
    %457 = vector.load %arg5[%456, %c0_211, %c1_212] : memref<8x18x18xf32, #tpu.memory_space<vmem>>, vector<1x16x16xf32>
    %458 = vector.shape_cast %457 : vector<1x16x16xf32> to vector<16x16xf32>
    %c0_i32_213 = arith.constant 0 : i32
    %459 = arith.addi %444, %c0_i32_213 : i32
    %c1_i32_214 = arith.constant 1 : i32
    %460 = arith.addi %459, %c1_i32_214 : i32
    %461 = arith.index_cast %460 : i32 to index
    %462 = memref.load %arg1[%461] : memref<36xf32, #tpu.memory_space<smem>>
    %463 = vector.broadcast %462 : f32 to vector<16x16xf32>
    %464 = arith.mulf %458, %463 : vector<16x16xf32>
    %465 = arith.addf %455, %464 : vector<16x16xf32>
    %466 = arith.index_cast %c4_i32_198 : i32 to index
    %c0_215 = arith.constant 0 : index
    %c2_216 = arith.constant 2 : index
    %467 = vector.load %arg5[%466, %c0_215, %c2_216] : memref<8x18x18xf32, #tpu.memory_space<vmem>>, vector<1x16x16xf32>
    %468 = vector.shape_cast %467 : vector<1x16x16xf32> to vector<16x16xf32>
    %c0_i32_217 = arith.constant 0 : i32
    %469 = arith.addi %444, %c0_i32_217 : i32
    %c2_i32_218 = arith.constant 2 : i32
    %470 = arith.addi %469, %c2_i32_218 : i32
    %471 = arith.index_cast %470 : i32 to index
    %472 = memref.load %arg1[%471] : memref<36xf32, #tpu.memory_space<smem>>
    %473 = vector.broadcast %472 : f32 to vector<16x16xf32>
    %474 = arith.mulf %468, %473 : vector<16x16xf32>
    %475 = arith.addf %465, %474 : vector<16x16xf32>
    %476 = arith.index_cast %c4_i32_198 : i32 to index
    %c1_219 = arith.constant 1 : index
    %c0_220 = arith.constant 0 : index
    %477 = vector.load %arg5[%476, %c1_219, %c0_220] : memref<8x18x18xf32, #tpu.memory_space<vmem>>, vector<1x16x16xf32>
    %478 = vector.shape_cast %477 : vector<1x16x16xf32> to vector<16x16xf32>
    %c3_i32_221 = arith.constant 3 : i32
    %479 = arith.addi %444, %c3_i32_221 : i32
    %c0_i32_222 = arith.constant 0 : i32
    %480 = arith.addi %479, %c0_i32_222 : i32
    %481 = arith.index_cast %480 : i32 to index
    %482 = memref.load %arg1[%481] : memref<36xf32, #tpu.memory_space<smem>>
    %483 = vector.broadcast %482 : f32 to vector<16x16xf32>
    %484 = arith.mulf %478, %483 : vector<16x16xf32>
    %485 = arith.addf %475, %484 : vector<16x16xf32>
    %486 = arith.index_cast %c4_i32_198 : i32 to index
    %c1_223 = arith.constant 1 : index
    %c1_224 = arith.constant 1 : index
    %487 = vector.load %arg5[%486, %c1_223, %c1_224] : memref<8x18x18xf32, #tpu.memory_space<vmem>>, vector<1x16x16xf32>
    %488 = vector.shape_cast %487 : vector<1x16x16xf32> to vector<16x16xf32>
    %c3_i32_225 = arith.constant 3 : i32
    %489 = arith.addi %444, %c3_i32_225 : i32
    %c1_i32_226 = arith.constant 1 : i32
    %490 = arith.addi %489, %c1_i32_226 : i32
    %491 = arith.index_cast %490 : i32 to index
    %492 = memref.load %arg1[%491] : memref<36xf32, #tpu.memory_space<smem>>
    %493 = vector.broadcast %492 : f32 to vector<16x16xf32>
    %494 = arith.mulf %488, %493 : vector<16x16xf32>
    %495 = arith.addf %485, %494 : vector<16x16xf32>
    %496 = arith.index_cast %c4_i32_198 : i32 to index
    %c1_227 = arith.constant 1 : index
    %c2_228 = arith.constant 2 : index
    %497 = vector.load %arg5[%496, %c1_227, %c2_228] : memref<8x18x18xf32, #tpu.memory_space<vmem>>, vector<1x16x16xf32>
    %498 = vector.shape_cast %497 : vector<1x16x16xf32> to vector<16x16xf32>
    %c3_i32_229 = arith.constant 3 : i32
    %499 = arith.addi %444, %c3_i32_229 : i32
    %c2_i32_230 = arith.constant 2 : i32
    %500 = arith.addi %499, %c2_i32_230 : i32
    %501 = arith.index_cast %500 : i32 to index
    %502 = memref.load %arg1[%501] : memref<36xf32, #tpu.memory_space<smem>>
    %503 = vector.broadcast %502 : f32 to vector<16x16xf32>
    %504 = arith.mulf %498, %503 : vector<16x16xf32>
    %505 = arith.addf %495, %504 : vector<16x16xf32>
    %506 = arith.index_cast %c4_i32_198 : i32 to index
    %c2_231 = arith.constant 2 : index
    %c0_232 = arith.constant 0 : index
    %507 = vector.load %arg5[%506, %c2_231, %c0_232] : memref<8x18x18xf32, #tpu.memory_space<vmem>>, vector<1x16x16xf32>
    %508 = vector.shape_cast %507 : vector<1x16x16xf32> to vector<16x16xf32>
    %c6_i32_233 = arith.constant 6 : i32
    %509 = arith.addi %444, %c6_i32_233 : i32
    %c0_i32_234 = arith.constant 0 : i32
    %510 = arith.addi %509, %c0_i32_234 : i32
    %511 = arith.index_cast %510 : i32 to index
    %512 = memref.load %arg1[%511] : memref<36xf32, #tpu.memory_space<smem>>
    %513 = vector.broadcast %512 : f32 to vector<16x16xf32>
    %514 = arith.mulf %508, %513 : vector<16x16xf32>
    %515 = arith.addf %505, %514 : vector<16x16xf32>
    %516 = arith.index_cast %c4_i32_198 : i32 to index
    %c2_235 = arith.constant 2 : index
    %c1_236 = arith.constant 1 : index
    %517 = vector.load %arg5[%516, %c2_235, %c1_236] : memref<8x18x18xf32, #tpu.memory_space<vmem>>, vector<1x16x16xf32>
    %518 = vector.shape_cast %517 : vector<1x16x16xf32> to vector<16x16xf32>
    %c6_i32_237 = arith.constant 6 : i32
    %519 = arith.addi %444, %c6_i32_237 : i32
    %c1_i32_238 = arith.constant 1 : i32
    %520 = arith.addi %519, %c1_i32_238 : i32
    %521 = arith.index_cast %520 : i32 to index
    %522 = memref.load %arg1[%521] : memref<36xf32, #tpu.memory_space<smem>>
    %523 = vector.broadcast %522 : f32 to vector<16x16xf32>
    %524 = arith.mulf %518, %523 : vector<16x16xf32>
    %525 = arith.addf %515, %524 : vector<16x16xf32>
    %526 = arith.index_cast %c4_i32_198 : i32 to index
    %c2_239 = arith.constant 2 : index
    %c2_240 = arith.constant 2 : index
    %527 = vector.load %arg5[%526, %c2_239, %c2_240] : memref<8x18x18xf32, #tpu.memory_space<vmem>>, vector<1x16x16xf32>
    %528 = vector.shape_cast %527 : vector<1x16x16xf32> to vector<16x16xf32>
    %c6_i32_241 = arith.constant 6 : i32
    %529 = arith.addi %444, %c6_i32_241 : i32
    %c2_i32_242 = arith.constant 2 : i32
    %530 = arith.addi %529, %c2_i32_242 : i32
    %531 = arith.index_cast %530 : i32 to index
    %532 = memref.load %arg1[%531] : memref<36xf32, #tpu.memory_space<smem>>
    %533 = vector.broadcast %532 : f32 to vector<16x16xf32>
    %534 = arith.mulf %528, %533 : vector<16x16xf32>
    %535 = arith.addf %525, %534 : vector<16x16xf32>
    %536 = arith.index_cast %c4_i32_198 : i32 to index
    %c0_243 = arith.constant 0 : index
    %c0_244 = arith.constant 0 : index
    %537 = vector.load %arg6[%536, %c0_243, %c0_244] : memref<8x16x16xf32, #tpu.memory_space<vmem>>, vector<1x16x16xf32>
    %538 = vector.shape_cast %537 : vector<1x16x16xf32> to vector<16x16xf32>
    %539 = vector.shape_cast %535 : vector<16x16xf32> to vector<1x16x16xf32>
    tpu.vector_store %arg6[%536, %c0_243, %c0_244], %539 {strides = array<i32>} : memref<8x16x16xf32, #tpu.memory_space<vmem>>, vector<1x16x16xf32>,
    %c5_i32 = arith.constant 5 : i32
    %c4_i32_245 = arith.constant 4 : i32
    %c0_i32_246 = arith.constant 0 : i32
    %540 = arith.cmpi eq, %c4_i32_245, %c0_i32_246 : i32
    %c1_i32_247 = arith.constant 1 : i32
    %541 = arith.select %540, %c1_i32_247, %c4_i32_245 : i32
    %542 = arith.remsi %c5_i32, %541 : i32
    %c0_i32_248 = arith.constant 0 : i32
    %543 = arith.cmpi ne, %542, %c0_i32_248 : i32
    %c0_i32_249 = arith.constant 0 : i32
    %544 = arith.cmpi slt, %542, %c0_i32_249 : i32
    %c0_i32_250 = arith.constant 0 : i32
    %545 = arith.cmpi slt, %541, %c0_i32_250 : i32
    %546 = arith.xori %544, %545 : i1
    %547 = arith.andi %546, %543 : i1
    %548 = arith.addi %542, %541 : i32
    %549 = arith.select %547, %548, %542 : i32
    %c9_i32_251 = arith.constant 9 : i32
    %550 = arith.muli %549, %c9_i32_251 : i32
    %cst_252 = arith.constant 0.000000e+00 : f32
    %551 = vector.broadcast %cst_252 : f32 to vector<16x16xf32>
    %552 = arith.index_cast %c5_i32 : i32 to index
    %c0_253 = arith.constant 0 : index
    %c0_254 = arith.constant 0 : index
    %553 = vector.load %arg5[%552, %c0_253, %c0_254] : memref<8x18x18xf32, #tpu.memory_space<vmem>>, vector<1x16x16xf32>
    %554 = vector.shape_cast %553 : vector<1x16x16xf32> to vector<16x16xf32>
    %c0_i32_255 = arith.constant 0 : i32
    %555 = arith.addi %550, %c0_i32_255 : i32
    %c0_i32_256 = arith.constant 0 : i32
    %556 = arith.addi %555, %c0_i32_256 : i32
    %557 = arith.index_cast %556 : i32 to index
    %558 = memref.load %arg1[%557] : memref<36xf32, #tpu.memory_space<smem>>
    %559 = vector.broadcast %558 : f32 to vector<16x16xf32>
    %560 = arith.mulf %554, %559 : vector<16x16xf32>
    %561 = arith.addf %551, %560 : vector<16x16xf32>
    %562 = arith.index_cast %c5_i32 : i32 to index
    %c0_257 = arith.constant 0 : index
    %c1_258 = arith.constant 1 : index
    %563 = vector.load %arg5[%562, %c0_257, %c1_258] : memref<8x18x18xf32, #tpu.memory_space<vmem>>, vector<1x16x16xf32>
    %564 = vector.shape_cast %563 : vector<1x16x16xf32> to vector<16x16xf32>
    %c0_i32_259 = arith.constant 0 : i32
    %565 = arith.addi %550, %c0_i32_259 : i32
    %c1_i32_260 = arith.constant 1 : i32
    %566 = arith.addi %565, %c1_i32_260 : i32
    %567 = arith.index_cast %566 : i32 to index
    %568 = memref.load %arg1[%567] : memref<36xf32, #tpu.memory_space<smem>>
    %569 = vector.broadcast %568 : f32 to vector<16x16xf32>
    %570 = arith.mulf %564, %569 : vector<16x16xf32>
    %571 = arith.addf %561, %570 : vector<16x16xf32>
    %572 = arith.index_cast %c5_i32 : i32 to index
    %c0_261 = arith.constant 0 : index
    %c2_262 = arith.constant 2 : index
    %573 = vector.load %arg5[%572, %c0_261, %c2_262] : memref<8x18x18xf32, #tpu.memory_space<vmem>>, vector<1x16x16xf32>
    %574 = vector.shape_cast %573 : vector<1x16x16xf32> to vector<16x16xf32>
    %c0_i32_263 = arith.constant 0 : i32
    %575 = arith.addi %550, %c0_i32_263 : i32
    %c2_i32_264 = arith.constant 2 : i32
    %576 = arith.addi %575, %c2_i32_264 : i32
    %577 = arith.index_cast %576 : i32 to index
    %578 = memref.load %arg1[%577] : memref<36xf32, #tpu.memory_space<smem>>
    %579 = vector.broadcast %578 : f32 to vector<16x16xf32>
    %580 = arith.mulf %574, %579 : vector<16x16xf32>
    %581 = arith.addf %571, %580 : vector<16x16xf32>
    %582 = arith.index_cast %c5_i32 : i32 to index
    %c1_265 = arith.constant 1 : index
    %c0_266 = arith.constant 0 : index
    %583 = vector.load %arg5[%582, %c1_265, %c0_266] : memref<8x18x18xf32, #tpu.memory_space<vmem>>, vector<1x16x16xf32>
    %584 = vector.shape_cast %583 : vector<1x16x16xf32> to vector<16x16xf32>
    %c3_i32_267 = arith.constant 3 : i32
    %585 = arith.addi %550, %c3_i32_267 : i32
    %c0_i32_268 = arith.constant 0 : i32
    %586 = arith.addi %585, %c0_i32_268 : i32
    %587 = arith.index_cast %586 : i32 to index
    %588 = memref.load %arg1[%587] : memref<36xf32, #tpu.memory_space<smem>>
    %589 = vector.broadcast %588 : f32 to vector<16x16xf32>
    %590 = arith.mulf %584, %589 : vector<16x16xf32>
    %591 = arith.addf %581, %590 : vector<16x16xf32>
    %592 = arith.index_cast %c5_i32 : i32 to index
    %c1_269 = arith.constant 1 : index
    %c1_270 = arith.constant 1 : index
    %593 = vector.load %arg5[%592, %c1_269, %c1_270] : memref<8x18x18xf32, #tpu.memory_space<vmem>>, vector<1x16x16xf32>
    %594 = vector.shape_cast %593 : vector<1x16x16xf32> to vector<16x16xf32>
    %c3_i32_271 = arith.constant 3 : i32
    %595 = arith.addi %550, %c3_i32_271 : i32
    %c1_i32_272 = arith.constant 1 : i32
    %596 = arith.addi %595, %c1_i32_272 : i32
    %597 = arith.index_cast %596 : i32 to index
    %598 = memref.load %arg1[%597] : memref<36xf32, #tpu.memory_space<smem>>
    %599 = vector.broadcast %598 : f32 to vector<16x16xf32>
    %600 = arith.mulf %594, %599 : vector<16x16xf32>
    %601 = arith.addf %591, %600 : vector<16x16xf32>
    %602 = arith.index_cast %c5_i32 : i32 to index
    %c1_273 = arith.constant 1 : index
    %c2_274 = arith.constant 2 : index
    %603 = vector.load %arg5[%602, %c1_273, %c2_274] : memref<8x18x18xf32, #tpu.memory_space<vmem>>, vector<1x16x16xf32>
    %604 = vector.shape_cast %603 : vector<1x16x16xf32> to vector<16x16xf32>
    %c3_i32_275 = arith.constant 3 : i32
    %605 = arith.addi %550, %c3_i32_275 : i32
    %c2_i32_276 = arith.constant 2 : i32
    %606 = arith.addi %605, %c2_i32_276 : i32
    %607 = arith.index_cast %606 : i32 to index
    %608 = memref.load %arg1[%607] : memref<36xf32, #tpu.memory_space<smem>>
    %609 = vector.broadcast %608 : f32 to vector<16x16xf32>
    %610 = arith.mulf %604, %609 : vector<16x16xf32>
    %611 = arith.addf %601, %610 : vector<16x16xf32>
    %612 = arith.index_cast %c5_i32 : i32 to index
    %c2_277 = arith.constant 2 : index
    %c0_278 = arith.constant 0 : index
    %613 = vector.load %arg5[%612, %c2_277, %c0_278] : memref<8x18x18xf32, #tpu.memory_space<vmem>>, vector<1x16x16xf32>
    %614 = vector.shape_cast %613 : vector<1x16x16xf32> to vector<16x16xf32>
    %c6_i32_279 = arith.constant 6 : i32
    %615 = arith.addi %550, %c6_i32_279 : i32
    %c0_i32_280 = arith.constant 0 : i32
    %616 = arith.addi %615, %c0_i32_280 : i32
    %617 = arith.index_cast %616 : i32 to index
    %618 = memref.load %arg1[%617] : memref<36xf32, #tpu.memory_space<smem>>
    %619 = vector.broadcast %618 : f32 to vector<16x16xf32>
    %620 = arith.mulf %614, %619 : vector<16x16xf32>
    %621 = arith.addf %611, %620 : vector<16x16xf32>
    %622 = arith.index_cast %c5_i32 : i32 to index
    %c2_281 = arith.constant 2 : index
    %c1_282 = arith.constant 1 : index
    %623 = vector.load %arg5[%622, %c2_281, %c1_282] : memref<8x18x18xf32, #tpu.memory_space<vmem>>, vector<1x16x16xf32>
    %624 = vector.shape_cast %623 : vector<1x16x16xf32> to vector<16x16xf32>
    %c6_i32_283 = arith.constant 6 : i32
    %625 = arith.addi %550, %c6_i32_283 : i32
    %c1_i32_284 = arith.constant 1 : i32
    %626 = arith.addi %625, %c1_i32_284 : i32
    %627 = arith.index_cast %626 : i32 to index
    %628 = memref.load %arg1[%627] : memref<36xf32, #tpu.memory_space<smem>>
    %629 = vector.broadcast %628 : f32 to vector<16x16xf32>
    %630 = arith.mulf %624, %629 : vector<16x16xf32>
    %631 = arith.addf %621, %630 : vector<16x16xf32>
    %632 = arith.index_cast %c5_i32 : i32 to index
    %c2_285 = arith.constant 2 : index
    %c2_286 = arith.constant 2 : index
    %633 = vector.load %arg5[%632, %c2_285, %c2_286] : memref<8x18x18xf32, #tpu.memory_space<vmem>>, vector<1x16x16xf32>
    %634 = vector.shape_cast %633 : vector<1x16x16xf32> to vector<16x16xf32>
    %c6_i32_287 = arith.constant 6 : i32
    %635 = arith.addi %550, %c6_i32_287 : i32
    %c2_i32_288 = arith.constant 2 : i32
    %636 = arith.addi %635, %c2_i32_288 : i32
    %637 = arith.index_cast %636 : i32 to index
    %638 = memref.load %arg1[%637] : memref<36xf32, #tpu.memory_space<smem>>
    %639 = vector.broadcast %638 : f32 to vector<16x16xf32>
    %640 = arith.mulf %634, %639 : vector<16x16xf32>
    %641 = arith.addf %631, %640 : vector<16x16xf32>
    %642 = arith.index_cast %c5_i32 : i32 to index
    %c0_289 = arith.constant 0 : index
    %c0_290 = arith.constant 0 : index
    %643 = vector.load %arg6[%642, %c0_289, %c0_290] : memref<8x16x16xf32, #tpu.memory_space<vmem>>, vector<1x16x16xf32>
    %644 = vector.shape_cast %643 : vector<1x16x16xf32> to vector<16x16xf32>
    %645 = vector.shape_cast %641 : vector<16x16xf32> to vector<1x16x16xf32>
    tpu.vector_store %arg6[%642, %c0_289, %c0_290], %645 {strides = array<i32>} : memref<8x16x16xf32, #tpu.memory_space<vmem>>, vector<1x16x16xf32>,
    %c6_i32_291 = arith.constant 6 : i32
    %c4_i32_292 = arith.constant 4 : i32
    %c0_i32_293 = arith.constant 0 : i32
    %646 = arith.cmpi eq, %c4_i32_292, %c0_i32_293 : i32
    %c1_i32_294 = arith.constant 1 : i32
    %647 = arith.select %646, %c1_i32_294, %c4_i32_292 : i32
    %648 = arith.remsi %c6_i32_291, %647 : i32
    %c0_i32_295 = arith.constant 0 : i32
    %649 = arith.cmpi ne, %648, %c0_i32_295 : i32
    %c0_i32_296 = arith.constant 0 : i32
    %650 = arith.cmpi slt, %648, %c0_i32_296 : i32
    %c0_i32_297 = arith.constant 0 : i32
    %651 = arith.cmpi slt, %647, %c0_i32_297 : i32
    %652 = arith.xori %650, %651 : i1
    %653 = arith.andi %652, %649 : i1
    %654 = arith.addi %648, %647 : i32
    %655 = arith.select %653, %654, %648 : i32
    %c9_i32_298 = arith.constant 9 : i32
    %656 = arith.muli %655, %c9_i32_298 : i32
    %cst_299 = arith.constant 0.000000e+00 : f32
    %657 = vector.broadcast %cst_299 : f32 to vector<16x16xf32>
    %658 = arith.index_cast %c6_i32_291 : i32 to index
    %c0_300 = arith.constant 0 : index
    %c0_301 = arith.constant 0 : index
    %659 = vector.load %arg5[%658, %c0_300, %c0_301] : memref<8x18x18xf32, #tpu.memory_space<vmem>>, vector<1x16x16xf32>
    %660 = vector.shape_cast %659 : vector<1x16x16xf32> to vector<16x16xf32>
    %c0_i32_302 = arith.constant 0 : i32
    %661 = arith.addi %656, %c0_i32_302 : i32
    %c0_i32_303 = arith.constant 0 : i32
    %662 = arith.addi %661, %c0_i32_303 : i32
    %663 = arith.index_cast %662 : i32 to index
    %664 = memref.load %arg1[%663] : memref<36xf32, #tpu.memory_space<smem>>
    %665 = vector.broadcast %664 : f32 to vector<16x16xf32>
    %666 = arith.mulf %660, %665 : vector<16x16xf32>
    %667 = arith.addf %657, %666 : vector<16x16xf32>
    %668 = arith.index_cast %c6_i32_291 : i32 to index
    %c0_304 = arith.constant 0 : index
    %c1_305 = arith.constant 1 : index
    %669 = vector.load %arg5[%668, %c0_304, %c1_305] : memref<8x18x18xf32, #tpu.memory_space<vmem>>, vector<1x16x16xf32>
    %670 = vector.shape_cast %669 : vector<1x16x16xf32> to vector<16x16xf32>
    %c0_i32_306 = arith.constant 0 : i32
    %671 = arith.addi %656, %c0_i32_306 : i32
    %c1_i32_307 = arith.constant 1 : i32
    %672 = arith.addi %671, %c1_i32_307 : i32
    %673 = arith.index_cast %672 : i32 to index
    %674 = memref.load %arg1[%673] : memref<36xf32, #tpu.memory_space<smem>>
    %675 = vector.broadcast %674 : f32 to vector<16x16xf32>
    %676 = arith.mulf %670, %675 : vector<16x16xf32>
    %677 = arith.addf %667, %676 : vector<16x16xf32>
    %678 = arith.index_cast %c6_i32_291 : i32 to index
    %c0_308 = arith.constant 0 : index
    %c2_309 = arith.constant 2 : index
    %679 = vector.load %arg5[%678, %c0_308, %c2_309] : memref<8x18x18xf32, #tpu.memory_space<vmem>>, vector<1x16x16xf32>
    %680 = vector.shape_cast %679 : vector<1x16x16xf32> to vector<16x16xf32>
    %c0_i32_310 = arith.constant 0 : i32
    %681 = arith.addi %656, %c0_i32_310 : i32
    %c2_i32_311 = arith.constant 2 : i32
    %682 = arith.addi %681, %c2_i32_311 : i32
    %683 = arith.index_cast %682 : i32 to index
    %684 = memref.load %arg1[%683] : memref<36xf32, #tpu.memory_space<smem>>
    %685 = vector.broadcast %684 : f32 to vector<16x16xf32>
    %686 = arith.mulf %680, %685 : vector<16x16xf32>
    %687 = arith.addf %677, %686 : vector<16x16xf32>
    %688 = arith.index_cast %c6_i32_291 : i32 to index
    %c1_312 = arith.constant 1 : index
    %c0_313 = arith.constant 0 : index
    %689 = vector.load %arg5[%688, %c1_312, %c0_313] : memref<8x18x18xf32, #tpu.memory_space<vmem>>, vector<1x16x16xf32>
    %690 = vector.shape_cast %689 : vector<1x16x16xf32> to vector<16x16xf32>
    %c3_i32_314 = arith.constant 3 : i32
    %691 = arith.addi %656, %c3_i32_314 : i32
    %c0_i32_315 = arith.constant 0 : i32
    %692 = arith.addi %691, %c0_i32_315 : i32
    %693 = arith.index_cast %692 : i32 to index
    %694 = memref.load %arg1[%693] : memref<36xf32, #tpu.memory_space<smem>>
    %695 = vector.broadcast %694 : f32 to vector<16x16xf32>
    %696 = arith.mulf %690, %695 : vector<16x16xf32>
    %697 = arith.addf %687, %696 : vector<16x16xf32>
    %698 = arith.index_cast %c6_i32_291 : i32 to index
    %c1_316 = arith.constant 1 : index
    %c1_317 = arith.constant 1 : index
    %699 = vector.load %arg5[%698, %c1_316, %c1_317] : memref<8x18x18xf32, #tpu.memory_space<vmem>>, vector<1x16x16xf32>
    %700 = vector.shape_cast %699 : vector<1x16x16xf32> to vector<16x16xf32>
    %c3_i32_318 = arith.constant 3 : i32
    %701 = arith.addi %656, %c3_i32_318 : i32
    %c1_i32_319 = arith.constant 1 : i32
    %702 = arith.addi %701, %c1_i32_319 : i32
    %703 = arith.index_cast %702 : i32 to index
    %704 = memref.load %arg1[%703] : memref<36xf32, #tpu.memory_space<smem>>
    %705 = vector.broadcast %704 : f32 to vector<16x16xf32>
    %706 = arith.mulf %700, %705 : vector<16x16xf32>
    %707 = arith.addf %697, %706 : vector<16x16xf32>
    %708 = arith.index_cast %c6_i32_291 : i32 to index
    %c1_320 = arith.constant 1 : index
    %c2_321 = arith.constant 2 : index
    %709 = vector.load %arg5[%708, %c1_320, %c2_321] : memref<8x18x18xf32, #tpu.memory_space<vmem>>, vector<1x16x16xf32>
    %710 = vector.shape_cast %709 : vector<1x16x16xf32> to vector<16x16xf32>
    %c3_i32_322 = arith.constant 3 : i32
    %711 = arith.addi %656, %c3_i32_322 : i32
    %c2_i32_323 = arith.constant 2 : i32
    %712 = arith.addi %711, %c2_i32_323 : i32
    %713 = arith.index_cast %712 : i32 to index
    %714 = memref.load %arg1[%713] : memref<36xf32, #tpu.memory_space<smem>>
    %715 = vector.broadcast %714 : f32 to vector<16x16xf32>
    %716 = arith.mulf %710, %715 : vector<16x16xf32>
    %717 = arith.addf %707, %716 : vector<16x16xf32>
    %718 = arith.index_cast %c6_i32_291 : i32 to index
    %c2_324 = arith.constant 2 : index
    %c0_325 = arith.constant 0 : index
    %719 = vector.load %arg5[%718, %c2_324, %c0_325] : memref<8x18x18xf32, #tpu.memory_space<vmem>>, vector<1x16x16xf32>
    %720 = vector.shape_cast %719 : vector<1x16x16xf32> to vector<16x16xf32>
    %c6_i32_326 = arith.constant 6 : i32
    %721 = arith.addi %656, %c6_i32_326 : i32
    %c0_i32_327 = arith.constant 0 : i32
    %722 = arith.addi %721, %c0_i32_327 : i32
    %723 = arith.index_cast %722 : i32 to index
    %724 = memref.load %arg1[%723] : memref<36xf32, #tpu.memory_space<smem>>
    %725 = vector.broadcast %724 : f32 to vector<16x16xf32>
    %726 = arith.mulf %720, %725 : vector<16x16xf32>
    %727 = arith.addf %717, %726 : vector<16x16xf32>
    %728 = arith.index_cast %c6_i32_291 : i32 to index
    %c2_328 = arith.constant 2 : index
    %c1_329 = arith.constant 1 : index
    %729 = vector.load %arg5[%728, %c2_328, %c1_329] : memref<8x18x18xf32, #tpu.memory_space<vmem>>, vector<1x16x16xf32>
    %730 = vector.shape_cast %729 : vector<1x16x16xf32> to vector<16x16xf32>
    %c6_i32_330 = arith.constant 6 : i32
    %731 = arith.addi %656, %c6_i32_330 : i32
    %c1_i32_331 = arith.constant 1 : i32
    %732 = arith.addi %731, %c1_i32_331 : i32
    %733 = arith.index_cast %732 : i32 to index
    %734 = memref.load %arg1[%733] : memref<36xf32, #tpu.memory_space<smem>>
    %735 = vector.broadcast %734 : f32 to vector<16x16xf32>
    %736 = arith.mulf %730, %735 : vector<16x16xf32>
    %737 = arith.addf %727, %736 : vector<16x16xf32>
    %738 = arith.index_cast %c6_i32_291 : i32 to index
    %c2_332 = arith.constant 2 : index
    %c2_333 = arith.constant 2 : index
    %739 = vector.load %arg5[%738, %c2_332, %c2_333] : memref<8x18x18xf32, #tpu.memory_space<vmem>>, vector<1x16x16xf32>
    %740 = vector.shape_cast %739 : vector<1x16x16xf32> to vector<16x16xf32>
    %c6_i32_334 = arith.constant 6 : i32
    %741 = arith.addi %656, %c6_i32_334 : i32
    %c2_i32_335 = arith.constant 2 : i32
    %742 = arith.addi %741, %c2_i32_335 : i32
    %743 = arith.index_cast %742 : i32 to index
    %744 = memref.load %arg1[%743] : memref<36xf32, #tpu.memory_space<smem>>
    %745 = vector.broadcast %744 : f32 to vector<16x16xf32>
    %746 = arith.mulf %740, %745 : vector<16x16xf32>
    %747 = arith.addf %737, %746 : vector<16x16xf32>
    %748 = arith.index_cast %c6_i32_291 : i32 to index
    %c0_336 = arith.constant 0 : index
    %c0_337 = arith.constant 0 : index
    %749 = vector.load %arg6[%748, %c0_336, %c0_337] : memref<8x16x16xf32, #tpu.memory_space<vmem>>, vector<1x16x16xf32>
    %750 = vector.shape_cast %749 : vector<1x16x16xf32> to vector<16x16xf32>
    %751 = vector.shape_cast %747 : vector<16x16xf32> to vector<1x16x16xf32>
    tpu.vector_store %arg6[%748, %c0_336, %c0_337], %751 {strides = array<i32>} : memref<8x16x16xf32, #tpu.memory_space<vmem>>, vector<1x16x16xf32>,
    %c7_i32 = arith.constant 7 : i32
    %c4_i32_338 = arith.constant 4 : i32
    %c0_i32_339 = arith.constant 0 : i32
    %752 = arith.cmpi eq, %c4_i32_338, %c0_i32_339 : i32
    %c1_i32_340 = arith.constant 1 : i32
    %753 = arith.select %752, %c1_i32_340, %c4_i32_338 : i32
    %754 = arith.remsi %c7_i32, %753 : i32
    %c0_i32_341 = arith.constant 0 : i32
    %755 = arith.cmpi ne, %754, %c0_i32_341 : i32
    %c0_i32_342 = arith.constant 0 : i32
    %756 = arith.cmpi slt, %754, %c0_i32_342 : i32
    %c0_i32_343 = arith.constant 0 : i32
    %757 = arith.cmpi slt, %753, %c0_i32_343 : i32
    %758 = arith.xori %756, %757 : i1
    %759 = arith.andi %758, %755 : i1
    %760 = arith.addi %754, %753 : i32
    %761 = arith.select %759, %760, %754 : i32
    %c9_i32_344 = arith.constant 9 : i32
    %762 = arith.muli %761, %c9_i32_344 : i32
    %cst_345 = arith.constant 0.000000e+00 : f32
    %763 = vector.broadcast %cst_345 : f32 to vector<16x16xf32>
    %764 = arith.index_cast %c7_i32 : i32 to index
    %c0_346 = arith.constant 0 : index
    %c0_347 = arith.constant 0 : index
    %765 = vector.load %arg5[%764, %c0_346, %c0_347] : memref<8x18x18xf32, #tpu.memory_space<vmem>>, vector<1x16x16xf32>
    %766 = vector.shape_cast %765 : vector<1x16x16xf32> to vector<16x16xf32>
    %c0_i32_348 = arith.constant 0 : i32
    %767 = arith.addi %762, %c0_i32_348 : i32
    %c0_i32_349 = arith.constant 0 : i32
    %768 = arith.addi %767, %c0_i32_349 : i32
    %769 = arith.index_cast %768 : i32 to index
    %770 = memref.load %arg1[%769] : memref<36xf32, #tpu.memory_space<smem>>
    %771 = vector.broadcast %770 : f32 to vector<16x16xf32>
    %772 = arith.mulf %766, %771 : vector<16x16xf32>
    %773 = arith.addf %763, %772 : vector<16x16xf32>
    %774 = arith.index_cast %c7_i32 : i32 to index
    %c0_350 = arith.constant 0 : index
    %c1_351 = arith.constant 1 : index
    %775 = vector.load %arg5[%774, %c0_350, %c1_351] : memref<8x18x18xf32, #tpu.memory_space<vmem>>, vector<1x16x16xf32>
    %776 = vector.shape_cast %775 : vector<1x16x16xf32> to vector<16x16xf32>
    %c0_i32_352 = arith.constant 0 : i32
    %777 = arith.addi %762, %c0_i32_352 : i32
    %c1_i32_353 = arith.constant 1 : i32
    %778 = arith.addi %777, %c1_i32_353 : i32
    %779 = arith.index_cast %778 : i32 to index
    %780 = memref.load %arg1[%779] : memref<36xf32, #tpu.memory_space<smem>>
    %781 = vector.broadcast %780 : f32 to vector<16x16xf32>
    %782 = arith.mulf %776, %781 : vector<16x16xf32>
    %783 = arith.addf %773, %782 : vector<16x16xf32>
    %784 = arith.index_cast %c7_i32 : i32 to index
    %c0_354 = arith.constant 0 : index
    %c2_355 = arith.constant 2 : index
    %785 = vector.load %arg5[%784, %c0_354, %c2_355] : memref<8x18x18xf32, #tpu.memory_space<vmem>>, vector<1x16x16xf32>
    %786 = vector.shape_cast %785 : vector<1x16x16xf32> to vector<16x16xf32>
    %c0_i32_356 = arith.constant 0 : i32
    %787 = arith.addi %762, %c0_i32_356 : i32
    %c2_i32_357 = arith.constant 2 : i32
    %788 = arith.addi %787, %c2_i32_357 : i32
    %789 = arith.index_cast %788 : i32 to index
    %790 = memref.load %arg1[%789] : memref<36xf32, #tpu.memory_space<smem>>
    %791 = vector.broadcast %790 : f32 to vector<16x16xf32>
    %792 = arith.mulf %786, %791 : vector<16x16xf32>
    %793 = arith.addf %783, %792 : vector<16x16xf32>
    %794 = arith.index_cast %c7_i32 : i32 to index
    %c1_358 = arith.constant 1 : index
    %c0_359 = arith.constant 0 : index
    %795 = vector.load %arg5[%794, %c1_358, %c0_359] : memref<8x18x18xf32, #tpu.memory_space<vmem>>, vector<1x16x16xf32>
    %796 = vector.shape_cast %795 : vector<1x16x16xf32> to vector<16x16xf32>
    %c3_i32_360 = arith.constant 3 : i32
    %797 = arith.addi %762, %c3_i32_360 : i32
    %c0_i32_361 = arith.constant 0 : i32
    %798 = arith.addi %797, %c0_i32_361 : i32
    %799 = arith.index_cast %798 : i32 to index
    %800 = memref.load %arg1[%799] : memref<36xf32, #tpu.memory_space<smem>>
    %801 = vector.broadcast %800 : f32 to vector<16x16xf32>
    %802 = arith.mulf %796, %801 : vector<16x16xf32>
    %803 = arith.addf %793, %802 : vector<16x16xf32>
    %804 = arith.index_cast %c7_i32 : i32 to index
    %c1_362 = arith.constant 1 : index
    %c1_363 = arith.constant 1 : index
    %805 = vector.load %arg5[%804, %c1_362, %c1_363] : memref<8x18x18xf32, #tpu.memory_space<vmem>>, vector<1x16x16xf32>
    %806 = vector.shape_cast %805 : vector<1x16x16xf32> to vector<16x16xf32>
    %c3_i32_364 = arith.constant 3 : i32
    %807 = arith.addi %762, %c3_i32_364 : i32
    %c1_i32_365 = arith.constant 1 : i32
    %808 = arith.addi %807, %c1_i32_365 : i32
    %809 = arith.index_cast %808 : i32 to index
    %810 = memref.load %arg1[%809] : memref<36xf32, #tpu.memory_space<smem>>
    %811 = vector.broadcast %810 : f32 to vector<16x16xf32>
    %812 = arith.mulf %806, %811 : vector<16x16xf32>
    %813 = arith.addf %803, %812 : vector<16x16xf32>
    %814 = arith.index_cast %c7_i32 : i32 to index
    %c1_366 = arith.constant 1 : index
    %c2_367 = arith.constant 2 : index
    %815 = vector.load %arg5[%814, %c1_366, %c2_367] : memref<8x18x18xf32, #tpu.memory_space<vmem>>, vector<1x16x16xf32>
    %816 = vector.shape_cast %815 : vector<1x16x16xf32> to vector<16x16xf32>
    %c3_i32_368 = arith.constant 3 : i32
    %817 = arith.addi %762, %c3_i32_368 : i32
    %c2_i32_369 = arith.constant 2 : i32
    %818 = arith.addi %817, %c2_i32_369 : i32
    %819 = arith.index_cast %818 : i32 to index
    %820 = memref.load %arg1[%819] : memref<36xf32, #tpu.memory_space<smem>>
    %821 = vector.broadcast %820 : f32 to vector<16x16xf32>
    %822 = arith.mulf %816, %821 : vector<16x16xf32>
    %823 = arith.addf %813, %822 : vector<16x16xf32>
    %824 = arith.index_cast %c7_i32 : i32 to index
    %c2_370 = arith.constant 2 : index
    %c0_371 = arith.constant 0 : index
    %825 = vector.load %arg5[%824, %c2_370, %c0_371] : memref<8x18x18xf32, #tpu.memory_space<vmem>>, vector<1x16x16xf32>
    %826 = vector.shape_cast %825 : vector<1x16x16xf32> to vector<16x16xf32>
    %c6_i32_372 = arith.constant 6 : i32
    %827 = arith.addi %762, %c6_i32_372 : i32
    %c0_i32_373 = arith.constant 0 : i32
    %828 = arith.addi %827, %c0_i32_373 : i32
    %829 = arith.index_cast %828 : i32 to index
    %830 = memref.load %arg1[%829] : memref<36xf32, #tpu.memory_space<smem>>
    %831 = vector.broadcast %830 : f32 to vector<16x16xf32>
    %832 = arith.mulf %826, %831 : vector<16x16xf32>
    %833 = arith.addf %823, %832 : vector<16x16xf32>
    %834 = arith.index_cast %c7_i32 : i32 to index
    %c2_374 = arith.constant 2 : index
    %c1_375 = arith.constant 1 : index
    %835 = vector.load %arg5[%834, %c2_374, %c1_375] : memref<8x18x18xf32, #tpu.memory_space<vmem>>, vector<1x16x16xf32>
    %836 = vector.shape_cast %835 : vector<1x16x16xf32> to vector<16x16xf32>
    %c6_i32_376 = arith.constant 6 : i32
    %837 = arith.addi %762, %c6_i32_376 : i32
    %c1_i32_377 = arith.constant 1 : i32
    %838 = arith.addi %837, %c1_i32_377 : i32
    %839 = arith.index_cast %838 : i32 to index
    %840 = memref.load %arg1[%839] : memref<36xf32, #tpu.memory_space<smem>>
    %841 = vector.broadcast %840 : f32 to vector<16x16xf32>
    %842 = arith.mulf %836, %841 : vector<16x16xf32>
    %843 = arith.addf %833, %842 : vector<16x16xf32>
    %844 = arith.index_cast %c7_i32 : i32 to index
    %c2_378 = arith.constant 2 : index
    %c2_379 = arith.constant 2 : index
    %845 = vector.load %arg5[%844, %c2_378, %c2_379] : memref<8x18x18xf32, #tpu.memory_space<vmem>>, vector<1x16x16xf32>
    %846 = vector.shape_cast %845 : vector<1x16x16xf32> to vector<16x16xf32>
    %c6_i32_380 = arith.constant 6 : i32
    %847 = arith.addi %762, %c6_i32_380 : i32
    %c2_i32_381 = arith.constant 2 : i32
    %848 = arith.addi %847, %c2_i32_381 : i32
    %849 = arith.index_cast %848 : i32 to index
    %850 = memref.load %arg1[%849] : memref<36xf32, #tpu.memory_space<smem>>
    %851 = vector.broadcast %850 : f32 to vector<16x16xf32>
    %852 = arith.mulf %846, %851 : vector<16x16xf32>
    %853 = arith.addf %843, %852 : vector<16x16xf32>
    %854 = arith.index_cast %c7_i32 : i32 to index
    %c0_382 = arith.constant 0 : index
    %c0_383 = arith.constant 0 : index
    %855 = vector.load %arg6[%854, %c0_382, %c0_383] : memref<8x16x16xf32, #tpu.memory_space<vmem>>, vector<1x16x16xf32>
    %856 = vector.shape_cast %855 : vector<1x16x16xf32> to vector<16x16xf32>
    %857 = vector.shape_cast %853 : vector<16x16xf32> to vector<1x16x16xf32>
    tpu.vector_store %arg6[%854, %c0_382, %c0_383], %857 {strides = array<i32>} : memref<8x16x16xf32, #tpu.memory_space<vmem>>, vector<1x16x16xf32>,
    %c8_i32 = arith.constant 8 : i32
    %c0_384 = arith.constant 0 : index
    %c0_385 = arith.constant 0 : index
    %858 = vector.load %arg2[%c0_384, %c0_385] : memref<8x4xf32, #tpu.memory_space<vmem>>, vector<8x4xf32>
    %c0_386 = arith.constant 0 : index
    %c0_387 = arith.constant 0 : index
    %c0_388 = arith.constant 0 : index
    %859 = vector.load %arg6[%c0_386, %c0_387, %c0_388] : memref<8x16x16xf32, #tpu.memory_space<vmem>>, vector<4x16x16xf32>
    %860 = vector.shape_cast %859 : vector<4x16x16xf32> to vector<4x256xf32>
    %cst_389 = arith.constant dense<0.000000e+00> : vector<8x256xf32>
    %861 = tpu.matmul %858, %860, %cst_389 {dimension_numbers = #tpu.dot_dimension_numbers<[1], [0], [0], [1], [0, 0, 1, 1], [], []>} : vector<8x4xf32>, vector<4x256xf32>, vector<8x256xf32> -> vector<8x256xf32>
    %c0_390 = arith.constant 0 : index
    %c0_391 = arith.constant 0 : index
    %c0_392 = arith.constant 0 : index
    %862 = vector.load %arg4[%c0_390, %c0_391, %c0_392] : memref<2x8x256xf32, #tpu.memory_space<vmem>>, vector<1x8x256xf32>
    %863 = vector.shape_cast %862 : vector<1x8x256xf32> to vector<8x256xf32>
    %864 = vector.shape_cast %861 : vector<8x256xf32> to vector<1x8x256xf32>
    tpu.vector_store %arg4[%c0_390, %c0_391, %c0_392], %864 {strides = array<i32>} : memref<2x8x256xf32, #tpu.memory_space<vmem>>, vector<1x8x256xf32>,
    %c4 = arith.constant 4 : index
    %c0_393 = arith.constant 0 : index
    %c0_394 = arith.constant 0 : index
    %865 = vector.load %arg6[%c4, %c0_393, %c0_394] : memref<8x16x16xf32, #tpu.memory_space<vmem>>, vector<4x16x16xf32>
    %866 = vector.shape_cast %865 : vector<4x16x16xf32> to vector<4x256xf32>
    %cst_395 = arith.constant dense<0.000000e+00> : vector<8x256xf32>
    %867 = tpu.matmul %858, %866, %cst_395 {dimension_numbers = #tpu.dot_dimension_numbers<[1], [0], [0], [1], [0, 0, 1, 1], [], []>} : vector<8x4xf32>, vector<4x256xf32>, vector<8x256xf32> -> vector<8x256xf32>
    %c1_396 = arith.constant 1 : index
    %c0_397 = arith.constant 0 : index
    %c0_398 = arith.constant 0 : index
    %868 = vector.load %arg4[%c1_396, %c0_397, %c0_398] : memref<2x8x256xf32, #tpu.memory_space<vmem>>, vector<1x8x256xf32>
    %869 = vector.shape_cast %868 : vector<1x8x256xf32> to vector<8x256xf32>
    %870 = vector.shape_cast %867 : vector<8x256xf32> to vector<1x8x256xf32>
    tpu.vector_store %arg4[%c1_396, %c0_397, %c0_398], %870 {strides = array<i32>} : memref<2x8x256xf32, #tpu.memory_space<vmem>>, vector<1x8x256xf32>,
    return
  }
  func.func @transform_0(%arg0: i32) -> i32 {
    %c0_i32 = arith.constant 0 : i32
    %c0_i32_0 = arith.constant 0 : i32
    return %c0_i32 : i32
  }
  func.func @transform_1(%arg0: i32) -> (i32, i32) {
    %c0_i32 = arith.constant 0 : i32
    %c0_i32_0 = arith.constant 0 : i32
    %c0_i32_1 = arith.constant 0 : i32
    return %c0_i32, %c0_i32_0 : i32, i32
  }
  func.func @transform_2(%arg0: i32) -> (i32, i32, i32) {
    %c0_i32 = arith.constant 0 : i32
    %c0_i32_0 = arith.constant 0 : i32
    %c0_i32_1 = arith.constant 0 : i32
    return %arg0, %c0_i32, %c0_i32_0 : i32, i32, i32
  }
  func.func @transform_3(%arg0: i32) -> (i32, i32, i32) {
    %c0_i32 = arith.constant 0 : i32
    %c0_i32_0 = arith.constant 0 : i32
    %c0_i32_1 = arith.constant 0 : i32
    return %arg0, %c0_i32, %c0_i32_0 : i32, i32, i32
  }
}

</mosaic_0001>

<llo_original>
// kernel: tpu_custom_call.1
$region0: #{tpu_custom_call.1}
  #allocation0 [shape = 'u32[]', space=smem, size = 0x4, offset = 0x4, fixed_abs, tag = 'smem constant byte address 0x4 - core index']
  #allocation1 [shape = 'u32[144,128]{1,0:T(1,128)}', space=vmem, size = 0x12000, scoped, tag = 'internal scratch']
  #allocation2 [shape = 'f32[8,18,18]{2,1,0:T(8,128)}', space=vmem, size = 0x18000, scoped, tag = 'scratch operand']
  #allocation3 [shape = 'f32[8,16,16]{2,1,0:T(8,128)}', space=vmem, size = 0x10000, scoped, tag = 'scratch operand']
  %s0 = inlined_call_operand.hbm [shape: f32[36], index: 0, kind: input, shape index: {}]
  %s1 = inlined_call_operand.hbm [shape: f32[8,4], index: 1, kind: input, shape index: {}]
  %s2 = inlined_call_operand.hbm [shape: f32[8,16,16], index: 2, kind: input, shape index: {}]
  %s3 = inlined_call_operand.hbm [shape: f32[2,8,256], index: 3, kind: output, shape index: {}]
  %s4 = sld [smem:[#allocation0]]
  $region34: #{tpu_custom_call.1} parent=0
    _
  %s6 = ssub.s32 1, %s4
  %s7 = scalar_select 0, %s6, %s4
  $region1: #{tpu_custom_call.1} parent=0
    #allocation4 [shape = 'u8[512]{0}', space=smem, size = 0x200, scoped, tag = 'input window, operand 0, single buffered']
    #allocation5 [shape = 's32[1]{0}', space=sflag, size = 0x4, scoped, tag = 'scoped memory for tpu_custom_call.1']
    #allocation6 [shape = 's32[1]{0}', space=sflag, size = 0x4, scoped, tag = 'scoped memory for tpu_custom_call.1']
    #allocation7 [shape = 's32[1]{0}', space=sflag, size = 0x4, scoped, tag = 'scoped memory for tpu_custom_call.1']
    #allocation8 [shape = 'u8[4096]{0}', space=vmem, size = 0x1000, scoped, tag = 'input window, operand 1, single buffered']
    #allocation9 [shape = 'u8[65536]{0}', space=vmem, size = 0x10000, scoped, tag = 'input window, operand 2, single buffered']
    #allocation10 [shape = 's32[1]{0}', space=sflag, size = 0x4, scoped, tag = 'scoped memory for tpu_custom_call.1']
    #allocation11 [shape = 'u8[16384]{0}', space=vmem, size = 0x4000, scoped, tag = 'output window, operand 0, single buffered']
    %8 = vsyncpa [#allocation7], 0
    %9 = vsyncpa [#allocation5], 0
    %10 = vsyncpa [#allocation10], 0
    %11 = vsyncpa [#allocation6], 0
    // Predicated region
    $region2: #{tpu_custom_call.1} parent=1 // pred_check
      _
    $region3: #{tpu_custom_call.1} parent=1 // pred_check_branch
      %13 = sbr.rel (0) target = $region5
    $region4: #{tpu_custom_call.1} parent=1 // pred_region
      %s15 = ssub.s32 16, 16
      %16 = vsyncadd [#allocation7], %s15
      %19 = dma.hbm_to_smem %s0, 16, [#allocation4], [#allocation7]
    $region5: #{tpu_custom_call.1} parent=1 // pred_fallthru
      _
    // Predicated region
    $region6: #{tpu_custom_call.1} parent=1 // pred_check
      _
    $region7: #{tpu_custom_call.1} parent=1 // pred_check_branch
      %21 = sbr.rel (0) target = $region9
    $region8: #{tpu_custom_call.1} parent=1 // pred_region
      %s23 = ssub.s32 128, 128
      %24 = vsyncadd [#allocation5], %s23
      %s26 = sshll.u32 [#allocation8], 4
      %s27 = int_to_ptr.vmem [resolvable:$true] %s26
      %29 = dma.hbm_to_vmem [thread:$0]  %s1, 128, %s27, [#allocation5]
    $region9: #{tpu_custom_call.1} parent=1 // pred_fallthru
      _
    // Predicated region
    $region10: #{tpu_custom_call.1} parent=1 // pred_check
      _
    $region11: #{tpu_custom_call.1} parent=1 // pred_check_branch
      %31 = sbr.rel (0) target = $region13
    $region12: #{tpu_custom_call.1} parent=1 // pred_region
      %s33 = ssub.s32 2048, 2048
      %34 = vsyncadd [#allocation10], %s33
      %s35 = sshll.u32 [#allocation9], 4
      %s36 = int_to_ptr.vmem [resolvable:$true] %s35
      %41 = dma.hbm_to_vmem [thread:$0]  %s2, 2048, %s36, [#allocation10], 128, 128, 8
    $region13: #{tpu_custom_call.1} parent=1 // pred_fallthru
      _
    // Predicated region
    $region14: #{tpu_custom_call.1} parent=1 // pred_check
      _
    $region15: #{tpu_custom_call.1} parent=1 // pred_check_branch
      %43 = sbr.rel (0) target = $region17
    $region16: #{tpu_custom_call.1} parent=1 // pred_region
      %44 = dma.done [#allocation7], 16
    $region17: #{tpu_custom_call.1} parent=1 // pred_fallthru
      _
    // Predicated region
    $region18: #{tpu_custom_call.1} parent=1 // pred_check
      _
    $region19: #{tpu_custom_call.1} parent=1 // pred_check_branch
      %46 = sbr.rel (0) target = $region21
    $region20: #{tpu_custom_call.1} parent=1 // pred_region
      %47 = dma.done [#allocation5], 128
    $region21: #{tpu_custom_call.1} parent=1 // pred_fallthru
      _
    // Predicated region
    $region22: #{tpu_custom_call.1} parent=1 // pred_check
      _
    $region23: #{tpu_custom_call.1} parent=1 // pred_check_branch
      %49 = sbr.rel (0) target = $region25
    $region24: #{tpu_custom_call.1} parent=1 // pred_region
      %50 = dma.done [#allocation10], 2048
    $region25: #{tpu_custom_call.1} parent=1 // pred_fallthru
      _
    %51 = sfence
    %vm52 = vcmask 139264
    %53 = vst.msk [vmem:[#allocation2] sm:$0x1] %vm52, 0.0
    %54 = vst.msk [vmem:[#allocation2 + $0x18] sm:$0x1] %vm52, 0.0
    %55 = vst.msk [vmem:[#allocation2 + $0x30] sm:$0x1] %vm52, 0.0
    %56 = vst.msk [vmem:[#allocation2 + $0x48] sm:$0x1] %vm52, 0.0
    %57 = vst.msk [vmem:[#allocation2 + $0x60] sm:$0x1] %vm52, 0.0
    %58 = vst.msk [vmem:[#allocation2 + $0x78] sm:$0x1] %vm52, 0.0
    %59 = vst.msk [vmem:[#allocation2 + $0x90] sm:$0x1] %vm52, 0.0
    %60 = vst.msk [vmem:[#allocation2 + $0xa8] sm:$0x1] %vm52, 0.0
    %61 = vst.msk [vmem:[#allocation2 + $0x11] sm:$0x1] %vm52, 0.0
    %62 = vst.msk [vmem:[#allocation2 + $0x29] sm:$0x1] %vm52, 0.0
    %63 = vst.msk [vmem:[#allocation2 + $0x41] sm:$0x1] %vm52, 0.0
    %64 = vst.msk [vmem:[#allocation2 + $0x59] sm:$0x1] %vm52, 0.0
    %65 = vst.msk [vmem:[#allocation2 + $0x71] sm:$0x1] %vm52, 0.0
    %66 = vst.msk [vmem:[#allocation2 + $0x89] sm:$0x1] %vm52, 0.0
    %67 = vst.msk [vmem:[#allocation2 + $0xa1] sm:$0x1] %vm52, 0.0
    %68 = vst.msk [vmem:[#allocation2 + $0xb9] sm:$0x1] %vm52, 0.0
    %vm69 = vcmask 7168
    %70 = vst.msk [vmem:[#allocation2] sm:$0xff] %vm69, 0.0
    %71 = vst.msk [vmem:[#allocation2 + $0x8] sm:$0xff] %vm69, 0.0
    %vm72 = vcmask 1024
    %73 = vst.msk [vmem:[#allocation2 + $0x10] sm:$0x3] %vm72, 0.0
    %74 = vst.msk [vmem:[#allocation2 + $0x18] sm:$0xff] %vm69, 0.0
    %75 = vst.msk [vmem:[#allocation2 + $0x20] sm:$0xff] %vm69, 0.0
    %76 = vst.msk [vmem:[#allocation2 + $0x28] sm:$0x3] %vm72, 0.0
    %77 = vst.msk [vmem:[#allocation2 + $0x30] sm:$0xff] %vm69, 0.0
    %78 = vst.msk [vmem:[#allocation2 + $0x38] sm:$0xff] %vm69, 0.0
    %79 = vst.msk [vmem:[#allocation2 + $0x40] sm:$0x3] %vm72, 0.0
    %80 = vst.msk [vmem:[#allocation2 + $0x48] sm:$0xff] %vm69, 0.0
    %81 = vst.msk [vmem:[#allocation2 + $0x50] sm:$0xff] %vm69, 0.0
    %82 = vst.msk [vmem:[#allocation2 + $0x58] sm:$0x3] %vm72, 0.0
    %83 = vst.msk [vmem:[#allocation2 + $0x60] sm:$0xff] %vm69, 0.0
    %84 = vst.msk [vmem:[#allocation2 + $0x68] sm:$0xff] %vm69, 0.0
    %85 = vst.msk [vmem:[#allocation2 + $0x70] sm:$0x3] %vm72, 0.0
    %86 = vst.msk [vmem:[#allocation2 + $0x78] sm:$0xff] %vm69, 0.0
    %87 = vst.msk [vmem:[#allocation2 + $0x80] sm:$0xff] %vm69, 0.0
    %88 = vst.msk [vmem:[#allocation2 + $0x88] sm:$0x3] %vm72, 0.0
    %89 = vst.msk [vmem:[#allocation2 + $0x90] sm:$0xff] %vm69, 0.0
    %90 = vst.msk [vmem:[#allocation2 + $0x98] sm:$0xff] %vm69, 0.0
    %91 = vst.msk [vmem:[#allocation2 + $0xa0] sm:$0x3] %vm72, 0.0
    %92 = vst.msk [vmem:[#allocation2 + $0xa8] sm:$0xff] %vm69, 0.0
    %93 = vst.msk [vmem:[#allocation2 + $0xb0] sm:$0xff] %vm69, 0.0
    %94 = vst.msk [vmem:[#allocation2 + $0xb8] sm:$0x3] %vm72, 0.0
    %vm95 = vcmask 146568
    %96 = vst.msk [vmem:[#allocation2] sm:$0xff] %vm95, 0.0
    %97 = vst.msk [vmem:[#allocation2 + $0x8] sm:$0xff] %vm95, 0.0
    %vm98 = vcmask 140424
    %99 = vst.msk [vmem:[#allocation2 + $0x10] sm:$0x3] %vm98, 0.0
    %100 = vst.msk [vmem:[#allocation2 + $0x18] sm:$0xff] %vm95, 0.0
    %101 = vst.msk [vmem:[#allocation2 + $0x20] sm:$0xff] %vm95, 0.0
    %102 = vst.msk [vmem:[#allocation2 + $0x28] sm:$0x3] %vm98, 0.0
    %103 = vst.msk [vmem:[#allocation2 + $0x30] sm:$0xff] %vm95, 0.0
    %104 = vst.msk [vmem:[#allocation2 + $0x38] sm:$0xff] %vm95, 0.0
    %105 = vst.msk [vmem:[#allocation2 + $0x40] sm:$0x3] %vm98, 0.0
    %106 = vst.msk [vmem:[#allocation2 + $0x48] sm:$0xff] %vm95, 0.0
    %107 = vst.msk [vmem:[#allocation2 + $0x50] sm:$0xff] %vm95, 0.0
    %108 = vst.msk [vmem:[#allocation2 + $0x58] sm:$0x3] %vm98, 0.0
    %109 = vst.msk [vmem:[#allocation2 + $0x60] sm:$0xff] %vm95, 0.0
    %110 = vst.msk [vmem:[#allocation2 + $0x68] sm:$0xff] %vm95, 0.0
    %111 = vst.msk [vmem:[#allocation2 + $0x70] sm:$0x3] %vm98, 0.0
    %112 = vst.msk [vmem:[#allocation2 + $0x78] sm:$0xff] %vm95, 0.0
    %113 = vst.msk [vmem:[#allocation2 + $0x80] sm:$0xff] %vm95, 0.0
    %114 = vst.msk [vmem:[#allocation2 + $0x88] sm:$0x3] %vm98, 0.0
    %115 = vst.msk [vmem:[#allocation2 + $0x90] sm:$0xff] %vm95, 0.0
    %116 = vst.msk [vmem:[#allocation2 + $0x98] sm:$0xff] %vm95, 0.0
    %117 = vst.msk [vmem:[#allocation2 + $0xa0] sm:$0x3] %vm98, 0.0
    %118 = vst.msk [vmem:[#allocation2 + $0xa8] sm:$0xff] %vm95, 0.0
    %119 = vst.msk [vmem:[#allocation2 + $0xb0] sm:$0xff] %vm95, 0.0
    %120 = vst.msk [vmem:[#allocation2 + $0xb8] sm:$0x3] %vm98, 0.0
    %v121 = vld [vmem:[#allocation9] sm:$0xff]
    %v122 = vld [vmem:[#allocation9 + $0x8] sm:$0xff]
    %v123 = vld [vmem:[#allocation9 + $0x10] sm:$0xff]
    %v124 = vld [vmem:[#allocation9 + $0x18] sm:$0xff]
    %v125 = vld [vmem:[#allocation9 + $0x20] sm:$0xff]
    %v126 = vld [vmem:[#allocation9 + $0x28] sm:$0xff]
    %v127 = vld [vmem:[#allocation9 + $0x30] sm:$0xff]
    %v128 = vld [vmem:[#allocation9 + $0x38] sm:$0xff]
    %v129 = vld [vmem:[#allocation9 + $0x40] sm:$0xff]
    %v130 = vld [vmem:[#allocation9 + $0x48] sm:$0xff]
    %v131 = vld [vmem:[#allocation9 + $0x50] sm:$0xff]
    %v132 = vld [vmem:[#allocation9 + $0x58] sm:$0xff]
    %v133 = vld [vmem:[#allocation9 + $0x60] sm:$0xff]
    %v134 = vld [vmem:[#allocation9 + $0x68] sm:$0xff]
    %v135 = vld [vmem:[#allocation9 + $0x70] sm:$0xff]
    %v136 = vld [vmem:[#allocation9 + $0x78] sm:$0xff]
    %153 = vrot.lane.b32.xlu0 %v121, 1
    %v154 = vpop.permute.xlu0 %153
    %155 = vrot.lane.b32.xlu0 %v122, 1
    %v156 = vpop.permute.xlu0 %155
    %157 = vrot.lane.b32.xlu0 %v123, 1
    %v158 = vpop.permute.xlu0 %157
    %159 = vrot.lane.b32.xlu0 %v124, 1
    %v160 = vpop.permute.xlu0 %159
    %161 = vrot.lane.b32.xlu0 %v125, 1
    %v162 = vpop.permute.xlu0 %161
    %163 = vrot.lane.b32.xlu0 %v126, 1
    %v164 = vpop.permute.xlu0 %163
    %165 = vrot.lane.b32.xlu0 %v127, 1
    %v166 = vpop.permute.xlu0 %165
    %167 = vrot.lane.b32.xlu0 %v128, 1
    %v168 = vpop.permute.xlu0 %167
    %169 = vrot.lane.b32.xlu0 %v129, 1
    %v170 = vpop.permute.xlu0 %169
    %171 = vrot.lane.b32.xlu0 %v130, 1
    %v172 = vpop.permute.xlu0 %171
    %173 = vrot.lane.b32.xlu0 %v131, 1
    %v174 = vpop.permute.xlu0 %173
    %175 = vrot.lane.b32.xlu0 %v132, 1
    %v176 = vpop.permute.xlu0 %175
    %177 = vrot.lane.b32.xlu0 %v133, 1
    %v178 = vpop.permute.xlu0 %177
    %179 = vrot.lane.b32.xlu0 %v134, 1
    %v180 = vpop.permute.xlu0 %179
    %181 = vrot.lane.b32.xlu0 %v135, 1
    %v182 = vpop.permute.xlu0 %181
    %183 = vrot.lane.b32.xlu0 %v136, 1
    %v184 = vpop.permute.xlu0 %183
    %vm201 = vcmask 138248
    %202 = vst.msk [vmem:[#allocation2 + $0x1] sm:$0xff] %vm201, %v154
    %203 = vst.msk [vmem:[#allocation2 + $0x9] sm:$0xff] %vm201, %v156
    %204 = vst.msk [vmem:[#allocation2 + $0x19] sm:$0xff] %vm201, %v158
    %205 = vst.msk [vmem:[#allocation2 + $0x21] sm:$0xff] %vm201, %v160
    %206 = vst.msk [vmem:[#allocation2 + $0x31] sm:$0xff] %vm201, %v162
    %207 = vst.msk [vmem:[#allocation2 + $0x39] sm:$0xff] %vm201, %v164
    %208 = vst.msk [vmem:[#allocation2 + $0x49] sm:$0xff] %vm201, %v166
    %209 = vst.msk [vmem:[#allocation2 + $0x51] sm:$0xff] %vm201, %v168
    %210 = vst.msk [vmem:[#allocation2 + $0x61] sm:$0xff] %vm201, %v170
    %211 = vst.msk [vmem:[#allocation2 + $0x69] sm:$0xff] %vm201, %v172
    %212 = vst.msk [vmem:[#allocation2 + $0x79] sm:$0xff] %vm201, %v174
    %213 = vst.msk [vmem:[#allocation2 + $0x81] sm:$0xff] %vm201, %v176
    %214 = vst.msk [vmem:[#allocation2 + $0x91] sm:$0xff] %vm201, %v178
    %215 = vst.msk [vmem:[#allocation2 + $0x99] sm:$0xff] %vm201, %v180
    %216 = vst.msk [vmem:[#allocation2 + $0xa9] sm:$0xff] %vm201, %v182
    %217 = vst.msk [vmem:[#allocation2 + $0xb1] sm:$0xff] %vm201, %v184
    %v218 = vld [vmem:[#allocation2] sm:$0xff]
    %v219 = vld [vmem:[#allocation2 + $0x8] sm:$0xff]
    %s220 = sld [smem:[#allocation4]]
    %v221 = vstv %s220
    %v222 = vmul.f32 %v218, %v221
    %v223 = vmul.f32 %v219, %v221
    %v224 = vadd.f32 %v222, 0.0
    %v225 = vadd.f32 %v223, 0.0
    %s226 = sld [smem:[#allocation4 + $0x1]]
    %v227 = vstv %s226
    %v228 = vmul.f32 %v218, %v227
    %v229 = vmul.f32 %v219, %v227
    %232 = vrot.lane.b32.xlu0 %v228, 127
    %v233 = vpop.permute.xlu0 %232
    %234 = vrot.lane.b32.xlu0 %v229, 127
    %v235 = vpop.permute.xlu0 %234
    %v238 = vadd.f32 %v224, %v233
    %v239 = vadd.f32 %v225, %v235
    %s240 = sld [smem:[#allocation4 + $0x2]]
    %v241 = vstv %s240
    %v242 = vmul.f32 %v218, %v241
    %v243 = vmul.f32 %v219, %v241
    %246 = vrot.lane.b32.xlu0 %v242, 126
    %v247 = vpop.permute.xlu0 %246
    %248 = vrot.lane.b32.xlu0 %v243, 126
    %v249 = vpop.permute.xlu0 %248
    %v252 = vadd.f32 %v238, %v247
    %v253 = vadd.f32 %v239, %v249
    %v254 = vld [vmem:[#allocation2 + $0x1] sm:$0xff]
    %v255 = vld [vmem:[#allocation2 + $0x9] sm:$0xff]
    %s256 = sld [smem:[#allocation4 + $0x3]]
    %v257 = vstv %s256
    %v258 = vmul.f32 %v254, %v257
    %v259 = vmul.f32 %v255, %v257
    %v260 = vadd.f32 %v252, %v258
    %v261 = vadd.f32 %v253, %v259
    %s262 = sld [smem:[#allocation4 + $0x4]]
    %v263 = vstv %s262
    %v264 = vmul.f32 %v254, %v263
    %v265 = vmul.f32 %v255, %v263
    %268 = vrot.lane.b32.xlu0 %v264, 127
    %v269 = vpop.permute.xlu0 %268
    %270 = vrot.lane.b32.xlu0 %v265, 127
    %v271 = vpop.permute.xlu0 %270
    %v274 = vadd.f32 %v260, %v269
    %v275 = vadd.f32 %v261, %v271
    %s276 = sld [smem:[#allocation4 + $0x5]]
    %v277 = vstv %s276
    %v278 = vmul.f32 %v254, %v277
    %v279 = vmul.f32 %v255, %v277
    %282 = vrot.lane.b32.xlu0 %v278, 126
    %v283 = vpop.permute.xlu0 %282
    %284 = vrot.lane.b32.xlu0 %v279, 126
    %v285 = vpop.permute.xlu0 %284
    %v288 = vadd.f32 %v274, %v283
    %v289 = vadd.f32 %v275, %v285
    %v290 = vld [vmem:[#allocation2 + $0x2] sm:$0xff]
    %v291 = vld [vmem:[#allocation2 + $0xa] sm:$0xff]
    %s292 = sld [smem:[#allocation4 + $0x6]]
    %v293 = vstv %s292
    %v294 = vmul.f32 %v290, %v293
    %v295 = vmul.f32 %v291, %v293
    %v296 = vadd.f32 %v288, %v294
    %v297 = vadd.f32 %v289, %v295
    %s298 = sld [smem:[#allocation4 + $0x7]]
    %v299 = vstv %s298
    %v300 = vmul.f32 %v290, %v299
    %v301 = vmul.f32 %v291, %v299
    %304 = vrot.lane.b32.xlu0 %v300, 127
    %v305 = vpop.permute.xlu0 %304
    %306 = vrot.lane.b32.xlu0 %v301, 127
    %v307 = vpop.permute.xlu0 %306
    %v310 = vadd.f32 %v296, %v305
    %v311 = vadd.f32 %v297, %v307
    %s312 = sld [smem:[#allocation4 + $0x8]]
    %v313 = vstv %s312
    %v314 = vmul.f32 %v290, %v313
    %v315 = vmul.f32 %v291, %v313
    %318 = vrot.lane.b32.xlu0 %v314, 126
    %v319 = vpop.permute.xlu0 %318
    %320 = vrot.lane.b32.xlu0 %v315, 126
    %v321 = vpop.permute.xlu0 %320
    %v324 = vadd.f32 %v310, %v319
    %v325 = vadd.f32 %v311, %v321
    %vm326 = vcmask 130048
    %327 = vst.msk [vmem:[#allocation3] sm:$0xff] %vm326, %v324
    %328 = vst.msk [vmem:[#allocation3 + $0x8] sm:$0xff] %vm326, %v325
    %s329 = scalar_lea.vmem [#allocation2], 24
    %v330 = vld [vmem:[%s329] sm:$0xff]
    %v331 = vld [vmem:[%s329 + $0x8] sm:$0xff]
    %s332 = sld [smem:[#allocation4 + $0x9]]
    %v333 = vstv %s332
    %v334 = vmul.f32 %v330, %v333
    %v335 = vmul.f32 %v331, %v333
    %v336 = vadd.f32 %v334, 0.0
    %v337 = vadd.f32 %v335, 0.0
    %s338 = sld [smem:[#allocation4 + $0xa]]
    %v339 = vstv %s338
    %v340 = vmul.f32 %v330, %v339
    %v341 = vmul.f32 %v331, %v339
    %344 = vrot.lane.b32.xlu0 %v340, 127
    %v345 = vpop.permute.xlu0 %344
    %346 = vrot.lane.b32.xlu0 %v341, 127
    %v347 = vpop.permute.xlu0 %346
    %v350 = vadd.f32 %v336, %v345
    %v351 = vadd.f32 %v337, %v347
    %s352 = sld [smem:[#allocation4 + $0xb]]
    %v353 = vstv %s352
    %v354 = vmul.f32 %v330, %v353
    %v355 = vmul.f32 %v331, %v353
    %358 = vrot.lane.b32.xlu0 %v354, 126
    %v359 = vpop.permute.xlu0 %358
    %360 = vrot.lane.b32.xlu0 %v355, 126
    %v361 = vpop.permute.xlu0 %360
    %v364 = vadd.f32 %v350, %v359
    %v365 = vadd.f32 %v351, %v361
    %v366 = vld [vmem:[%s329 + $0x1] sm:$0xff]
    %v367 = vld [vmem:[%s329 + $0x9] sm:$0xff]
    %s368 = sld [smem:[#allocation4 + $0xc]]
    %v369 = vstv %s368
    %v370 = vmul.f32 %v366, %v369
    %v371 = vmul.f32 %v367, %v369
    %v372 = vadd.f32 %v364, %v370
    %v373 = vadd.f32 %v365, %v371
    %s374 = sld [smem:[#allocation4 + $0xd]]
    %v375 = vstv %s374
    %v376 = vmul.f32 %v366, %v375
    %v377 = vmul.f32 %v367, %v375
    %380 = vrot.lane.b32.xlu0 %v376, 127
    %v381 = vpop.permute.xlu0 %380
    %382 = vrot.lane.b32.xlu0 %v377, 127
    %v383 = vpop.permute.xlu0 %382
    %v386 = vadd.f32 %v372, %v381
    %v387 = vadd.f32 %v373, %v383
    %s388 = sld [smem:[#allocation4 + $0xe]]
    %v389 = vstv %s388
    %v390 = vmul.f32 %v366, %v389
    %v391 = vmul.f32 %v367, %v389
    %394 = vrot.lane.b32.xlu0 %v390, 126
    %v395 = vpop.permute.xlu0 %394
    %396 = vrot.lane.b32.xlu0 %v391, 126
    %v397 = vpop.permute.xlu0 %396
    %v400 = vadd.f32 %v386, %v395
    %v401 = vadd.f32 %v387, %v397
    %v402 = vld [vmem:[%s329 + $0x2] sm:$0xff]
    %v403 = vld [vmem:[%s329 + $0xa] sm:$0xff]
    %s404 = sld [smem:[#allocation4 + $0xf]]
    %v405 = vstv %s404
    %v406 = vmul.f32 %v402, %v405
    %v407 = vmul.f32 %v403, %v405
    %v408 = vadd.f32 %v400, %v406
    %v409 = vadd.f32 %v401, %v407
    %s410 = sld [smem:[#allocation4 + $0x10]]
    %v411 = vstv %s410
    %v412 = vmul.f32 %v402, %v411
    %v413 = vmul.f32 %v403, %v411
    %416 = vrot.lane.b32.xlu0 %v412, 127
    %v417 = vpop.permute.xlu0 %416
    %418 = vrot.lane.b32.xlu0 %v413, 127
    %v419 = vpop.permute.xlu0 %418
    %v422 = vadd.f32 %v408, %v417
    %v423 = vadd.f32 %v409, %v419
    %s424 = sld [smem:[#allocation4 + $0x11]]
    %v425 = vstv %s424
    %v426 = vmul.f32 %v402, %v425
    %v427 = vmul.f32 %v403, %v425
    %430 = vrot.lane.b32.xlu0 %v426, 126
    %v431 = vpop.permute.xlu0 %430
    %432 = vrot.lane.b32.xlu0 %v427, 126
    %v433 = vpop.permute.xlu0 %432
    %v436 = vadd.f32 %v422, %v431
    %v437 = vadd.f32 %v423, %v433
    %s438 = scalar_lea.vmem [#allocation3], 16
    %439 = vst.msk [vmem:[%s438] sm:$0xff] %vm326, %v436
    %440 = vst.msk [vmem:[%s438 + $0x8] sm:$0xff] %vm326, %v437
    %s441 = scalar_lea.vmem [#allocation2], 48
    %v442 = vld [vmem:[%s441] sm:$0xff]
    %v443 = vld [vmem:[%s441 + $0x8] sm:$0xff]
    %s444 = sld [smem:[#allocation4 + $0x12]]
    %v445 = vstv %s444
    %v446 = vmul.f32 %v442, %v445
    %v447 = vmul.f32 %v443, %v445
    %v448 = vadd.f32 %v446, 0.0
    %v449 = vadd.f32 %v447, 0.0
    %s450 = sld [smem:[#allocation4 + $0x13]]
    %v451 = vstv %s450
    %v452 = vmul.f32 %v442, %v451
    %v453 = vmul.f32 %v443, %v451
    %456 = vrot.lane.b32.xlu0 %v452, 127
    %v457 = vpop.permute.xlu0 %456
    %458 = vrot.lane.b32.xlu0 %v453, 127
    %v459 = vpop.permute.xlu0 %458
    %v462 = vadd.f32 %v448, %v457
    %v463 = vadd.f32 %v449, %v459
    %s464 = sld [smem:[#allocation4 + $0x14]]
    %v465 = vstv %s464
    %v466 = vmul.f32 %v442, %v465
    %v467 = vmul.f32 %v443, %v465
    %470 = vrot.lane.b32.xlu0 %v466, 126
    %v471 = vpop.permute.xlu0 %470
    %472 = vrot.lane.b32.xlu0 %v467, 126
    %v473 = vpop.permute.xlu0 %472
    %v476 = vadd.f32 %v462, %v471
    %v477 = vadd.f32 %v463, %v473
    %v478 = vld [vmem:[%s441 + $0x1] sm:$0xff]
    %v479 = vld [vmem:[%s441 + $0x9] sm:$0xff]
    %s480 = sld [smem:[#allocation4 + $0x15]]
    %v481 = vstv %s480
    %v482 = vmul.f32 %v478, %v481
    %v483 = vmul.f32 %v479, %v481
    %v484 = vadd.f32 %v476, %v482
    %v485 = vadd.f32 %v477, %v483
    %s486 = sld [smem:[#allocation4 + $0x16]]
    %v487 = vstv %s486
    %v488 = vmul.f32 %v478, %v487
    %v489 = vmul.f32 %v479, %v487
    %492 = vrot.lane.b32.xlu0 %v488, 127
    %v493 = vpop.permute.xlu0 %492
    %494 = vrot.lane.b32.xlu0 %v489, 127
    %v495 = vpop.permute.xlu0 %494
    %v498 = vadd.f32 %v484, %v493
    %v499 = vadd.f32 %v485, %v495
    %s500 = sld [smem:[#allocation4 + $0x17]]
    %v501 = vstv %s500
    %v502 = vmul.f32 %v478, %v501
    %v503 = vmul.f32 %v479, %v501
    %506 = vrot.lane.b32.xlu0 %v502, 126
    %v507 = vpop.permute.xlu0 %506
    %508 = vrot.lane.b32.xlu0 %v503, 126
    %v509 = vpop.permute.xlu0 %508
    %v512 = vadd.f32 %v498, %v507
    %v513 = vadd.f32 %v499, %v509
    %v514 = vld [vmem:[%s441 + $0x2] sm:$0xff]
    %v515 = vld [vmem:[%s441 + $0xa] sm:$0xff]
    %s516 = sld [smem:[#allocation4 + $0x18]]
    %v517 = vstv %s516
    %v518 = vmul.f32 %v514, %v517
    %v519 = vmul.f32 %v515, %v517
    %v520 = vadd.f32 %v512, %v518
    %v521 = vadd.f32 %v513, %v519
    %s522 = sld [smem:[#allocation4 + $0x19]]
    %v523 = vstv %s522
    %v524 = vmul.f32 %v514, %v523
    %v525 = vmul.f32 %v515, %v523
    %528 = vrot.lane.b32.xlu0 %v524, 127
    %v529 = vpop.permute.xlu0 %528
    %530 = vrot.lane.b32.xlu0 %v525, 127
    %v531 = vpop.permute.xlu0 %530
    %v534 = vadd.f32 %v520, %v529
    %v535 = vadd.f32 %v521, %v531
    %s536 = sld [smem:[#allocation4 + $0x1a]]
    %v537 = vstv %s536
    %v538 = vmul.f32 %v514, %v537
    %v539 = vmul.f32 %v515, %v537
    %542 = vrot.lane.b32.xlu0 %v538, 126
    %v543 = vpop.permute.xlu0 %542
    %544 = vrot.lane.b32.xlu0 %v539, 126
    %v545 = vpop.permute.xlu0 %544
    %v548 = vadd.f32 %v534, %v543
    %v549 = vadd.f32 %v535, %v545
    %s550 = scalar_lea.vmem [#allocation3], 32
    %551 = vst.msk [vmem:[%s550] sm:$0xff] %vm326, %v548
    %552 = vst.msk [vmem:[%s550 + $0x8] sm:$0xff] %vm326, %v549
    %s553 = scalar_lea.vmem [#allocation2], 72
    %v554 = vld [vmem:[%s553] sm:$0xff]
    %v555 = vld [vmem:[%s553 + $0x8] sm:$0xff]
    %s556 = sld [smem:[#allocation4 + $0x1b]]
    %v557 = vstv %s556
    %v558 = vmul.f32 %v554, %v557
    %v559 = vmul.f32 %v555, %v557
    %v560 = vadd.f32 %v558, 0.0
    %v561 = vadd.f32 %v559, 0.0
    %s562 = sld [smem:[#allocation4 + $0x1c]]
    %v563 = vstv %s562
    %v564 = vmul.f32 %v554, %v563
    %v565 = vmul.f32 %v555, %v563
    %568 = vrot.lane.b32.xlu0 %v564, 127
    %v569 = vpop.permute.xlu0 %568
    %570 = vrot.lane.b32.xlu0 %v565, 127
    %v571 = vpop.permute.xlu0 %570
    %v574 = vadd.f32 %v560, %v569
    %v575 = vadd.f32 %v561, %v571
    %s576 = sld [smem:[#allocation4 + $0x1d]]
    %v577 = vstv %s576
    %v578 = vmul.f32 %v554, %v577
    %v579 = vmul.f32 %v555, %v577
    %582 = vrot.lane.b32.xlu0 %v578, 126
    %v583 = vpop.permute.xlu0 %582
    %584 = vrot.lane.b32.xlu0 %v579, 126
    %v585 = vpop.permute.xlu0 %584
    %v588 = vadd.f32 %v574, %v583
    %v589 = vadd.f32 %v575, %v585
    %v590 = vld [vmem:[%s553 + $0x1] sm:$0xff]
    %v591 = vld [vmem:[%s553 + $0x9] sm:$0xff]
    %s592 = sld [smem:[#allocation4 + $0x1e]]
    %v593 = vstv %s592
    %v594 = vmul.f32 %v590, %v593
    %v595 = vmul.f32 %v591, %v593
    %v596 = vadd.f32 %v588, %v594
    %v597 = vadd.f32 %v589, %v595
    %s598 = sld [smem:[#allocation4 + $0x1f]]
    %v599 = vstv %s598
    %v600 = vmul.f32 %v590, %v599
    %v601 = vmul.f32 %v591, %v599
    %604 = vrot.lane.b32.xlu0 %v600, 127
    %v605 = vpop.permute.xlu0 %604
    %606 = vrot.lane.b32.xlu0 %v601, 127
    %v607 = vpop.permute.xlu0 %606
    %v610 = vadd.f32 %v596, %v605
    %v611 = vadd.f32 %v597, %v607
    %s612 = sld [smem:[#allocation4 + $0x20]]
    %v613 = vstv %s612
    %v614 = vmul.f32 %v590, %v613
    %v615 = vmul.f32 %v591, %v613
    %618 = vrot.lane.b32.xlu0 %v614, 126
    %v619 = vpop.permute.xlu0 %618
    %620 = vrot.lane.b32.xlu0 %v615, 126
    %v621 = vpop.permute.xlu0 %620
    %v624 = vadd.f32 %v610, %v619
    %v625 = vadd.f32 %v611, %v621
    %v626 = vld [vmem:[%s553 + $0x2] sm:$0xff]
    %v627 = vld [vmem:[%s553 + $0xa] sm:$0xff]
    %s628 = sld [smem:[#allocation4 + $0x21]]
    %v629 = vstv %s628
    %v630 = vmul.f32 %v626, %v629
    %v631 = vmul.f32 %v627, %v629
    %v632 = vadd.f32 %v624, %v630
    %v633 = vadd.f32 %v625, %v631
    %s634 = sld [smem:[#allocation4 + $0x22]]
    %v635 = vstv %s634
    %v636 = vmul.f32 %v626, %v635
    %v637 = vmul.f32 %v627, %v635
    %640 = vrot.lane.b32.xlu0 %v636, 127
    %v641 = vpop.permute.xlu0 %640
    %642 = vrot.lane.b32.xlu0 %v637, 127
    %v643 = vpop.permute.xlu0 %642
    %v646 = vadd.f32 %v632, %v641
    %v647 = vadd.f32 %v633, %v643
    %s648 = sld [smem:[#allocation4 + $0x23]]
    %v649 = vstv %s648
    %v650 = vmul.f32 %v626, %v649
    %v651 = vmul.f32 %v627, %v649
    %654 = vrot.lane.b32.xlu0 %v650, 126
    %v655 = vpop.permute.xlu0 %654
    %656 = vrot.lane.b32.xlu0 %v651, 126
    %v657 = vpop.permute.xlu0 %656
    %v660 = vadd.f32 %v646, %v655
    %v661 = vadd.f32 %v647, %v657
    %s662 = scalar_lea.vmem [#allocation3], 48
    %663 = vst.msk [vmem:[%s662] sm:$0xff] %vm326, %v660
    %664 = vst.msk [vmem:[%s662 + $0x8] sm:$0xff] %vm326, %v661
    %s665 = scalar_lea.vmem [#allocation2], 96
    %v666 = vld [vmem:[%s665] sm:$0xff]
    %v667 = vld [vmem:[%s665 + $0x8] sm:$0xff]
    %s668 = sld [smem:[#allocation4]]
    %v669 = vstv %s668
    %v670 = vmul.f32 %v666, %v669
    %v671 = vmul.f32 %v667, %v669
    %v672 = vadd.f32 %v670, 0.0
    %v673 = vadd.f32 %v671, 0.0
    %s674 = sld [smem:[#allocation4 + $0x1]]
    %v675 = vstv %s674
    %v676 = vmul.f32 %v666, %v675
    %v677 = vmul.f32 %v667, %v675
    %680 = vrot.lane.b32.xlu0 %v676, 127
    %v681 = vpop.permute.xlu0 %680
    %682 = vrot.lane.b32.xlu0 %v677, 127
    %v683 = vpop.permute.xlu0 %682
    %v686 = vadd.f32 %v672, %v681
    %v687 = vadd.f32 %v673, %v683
    %s688 = sld [smem:[#allocation4 + $0x2]]
    %v689 = vstv %s688
    %v690 = vmul.f32 %v666, %v689
    %v691 = vmul.f32 %v667, %v689
    %694 = vrot.lane.b32.xlu0 %v690, 126
    %v695 = vpop.permute.xlu0 %694
    %696 = vrot.lane.b32.xlu0 %v691, 126
    %v697 = vpop.permute.xlu0 %696
    %v700 = vadd.f32 %v686, %v695
    %v701 = vadd.f32 %v687, %v697
    %v702 = vld [vmem:[%s665 + $0x1] sm:$0xff]
    %v703 = vld [vmem:[%s665 + $0x9] sm:$0xff]
    %s704 = sld [smem:[#allocation4 + $0x3]]
    %v705 = vstv %s704
    %v706 = vmul.f32 %v702, %v705
    %v707 = vmul.f32 %v703, %v705
    %v708 = vadd.f32 %v700, %v706
    %v709 = vadd.f32 %v701, %v707
    %s710 = sld [smem:[#allocation4 + $0x4]]
    %v711 = vstv %s710
    %v712 = vmul.f32 %v702, %v711
    %v713 = vmul.f32 %v703, %v711
    %716 = vrot.lane.b32.xlu0 %v712, 127
    %v717 = vpop.permute.xlu0 %716
    %718 = vrot.lane.b32.xlu0 %v713, 127
    %v719 = vpop.permute.xlu0 %718
    %v722 = vadd.f32 %v708, %v717
    %v723 = vadd.f32 %v709, %v719
    %s724 = sld [smem:[#allocation4 + $0x5]]
    %v725 = vstv %s724
    %v726 = vmul.f32 %v702, %v725
    %v727 = vmul.f32 %v703, %v725
    %730 = vrot.lane.b32.xlu0 %v726, 126
    %v731 = vpop.permute.xlu0 %730
    %732 = vrot.lane.b32.xlu0 %v727, 126
    %v733 = vpop.permute.xlu0 %732
    %v736 = vadd.f32 %v722, %v731
    %v737 = vadd.f32 %v723, %v733
    %v738 = vld [vmem:[%s665 + $0x2] sm:$0xff]
    %v739 = vld [vmem:[%s665 + $0xa] sm:$0xff]
    %s740 = sld [smem:[#allocation4 + $0x6]]
    %v741 = vstv %s740
    %v742 = vmul.f32 %v738, %v741
    %v743 = vmul.f32 %v739, %v741
    %v744 = vadd.f32 %v736, %v742
    %v745 = vadd.f32 %v737, %v743
    %s746 = sld [smem:[#allocation4 + $0x7]]
    %v747 = vstv %s746
    %v748 = vmul.f32 %v738, %v747
    %v749 = vmul.f32 %v739, %v747
    %752 = vrot.lane.b32.xlu0 %v748, 127
    %v753 = vpop.permute.xlu0 %752
    %754 = vrot.lane.b32.xlu0 %v749, 127
    %v755 = vpop.permute.xlu0 %754
    %v758 = vadd.f32 %v744, %v753
    %v759 = vadd.f32 %v745, %v755
    %s760 = sld [smem:[#allocation4 + $0x8]]
    %v761 = vstv %s760
    %v762 = vmul.f32 %v738, %v761
    %v763 = vmul.f32 %v739, %v761
    %766 = vrot.lane.b32.xlu0 %v762, 126
    %v767 = vpop.permute.xlu0 %766
    %768 = vrot.lane.b32.xlu0 %v763, 126
    %v769 = vpop.permute.xlu0 %768
    %v772 = vadd.f32 %v758, %v767
    %v773 = vadd.f32 %v759, %v769
    %s774 = scalar_lea.vmem [#allocation3], 64
    %775 = vst.msk [vmem:[%s774] sm:$0xff] %vm326, %v772
    %776 = vst.msk [vmem:[%s774 + $0x8] sm:$0xff] %vm326, %v773
    %s777 = scalar_lea.vmem [#allocation2], 120
    %v778 = vld [vmem:[%s777] sm:$0xff]
    %v779 = vld [vmem:[%s777 + $0x8] sm:$0xff]
    %s780 = sld [smem:[#allocation4 + $0x9]]
    %v781 = vstv %s780
    %v782 = vmul.f32 %v778, %v781
    %v783 = vmul.f32 %v779, %v781
    %v784 = vadd.f32 %v782, 0.0
    %v785 = vadd.f32 %v783, 0.0
    %s786 = sld [smem:[#allocation4 + $0xa]]
    %v787 = vstv %s786
    %v788 = vmul.f32 %v778, %v787
    %v789 = vmul.f32 %v779, %v787
    %792 = vrot.lane.b32.xlu0 %v788, 127
    %v793 = vpop.permute.xlu0 %792
    %794 = vrot.lane.b32.xlu0 %v789, 127
    %v795 = vpop.permute.xlu0 %794
    %v798 = vadd.f32 %v784, %v793
    %v799 = vadd.f32 %v785, %v795
    %s800 = sld [smem:[#allocation4 + $0xb]]
    %v801 = vstv %s800
    %v802 = vmul.f32 %v778, %v801
    %v803 = vmul.f32 %v779, %v801
    %806 = vrot.lane.b32.xlu0 %v802, 126
    %v807 = vpop.permute.xlu0 %806
    %808 = vrot.lane.b32.xlu0 %v803, 126
    %v809 = vpop.permute.xlu0 %808
    %v812 = vadd.f32 %v798, %v807
    %v813 = vadd.f32 %v799, %v809
    %v814 = vld [vmem:[%s777 + $0x1] sm:$0xff]
    %v815 = vld [vmem:[%s777 + $0x9] sm:$0xff]
    %s816 = sld [smem:[#allocation4 + $0xc]]
    %v817 = vstv %s816
    %v818 = vmul.f32 %v814, %v817
    %v819 = vmul.f32 %v815, %v817
    %v820 = vadd.f32 %v812, %v818
    %v821 = vadd.f32 %v813, %v819
    %s822 = sld [smem:[#allocation4 + $0xd]]
    %v823 = vstv %s822
    %v824 = vmul.f32 %v814, %v823
    %v825 = vmul.f32 %v815, %v823
    %828 = vrot.lane.b32.xlu0 %v824, 127
    %v829 = vpop.permute.xlu0 %828
    %830 = vrot.lane.b32.xlu0 %v825, 127
    %v831 = vpop.permute.xlu0 %830
    %v834 = vadd.f32 %v820, %v829
    %v835 = vadd.f32 %v821, %v831
    %s836 = sld [smem:[#allocation4 + $0xe]]
    %v837 = vstv %s836
    %v838 = vmul.f32 %v814, %v837
    %v839 = vmul.f32 %v815, %v837
    %842 = vrot.lane.b32.xlu0 %v838, 126
    %v843 = vpop.permute.xlu0 %842
    %844 = vrot.lane.b32.xlu0 %v839, 126
    %v845 = vpop.permute.xlu0 %844
    %v848 = vadd.f32 %v834, %v843
    %v849 = vadd.f32 %v835, %v845
    %v850 = vld [vmem:[%s777 + $0x2] sm:$0xff]
    %v851 = vld [vmem:[%s777 + $0xa] sm:$0xff]
    %s852 = sld [smem:[#allocation4 + $0xf]]
    %v853 = vstv %s852
    %v854 = vmul.f32 %v850, %v853
    %v855 = vmul.f32 %v851, %v853
    %v856 = vadd.f32 %v848, %v854
    %v857 = vadd.f32 %v849, %v855
    %s858 = sld [smem:[#allocation4 + $0x10]]
    %v859 = vstv %s858
    %v860 = vmul.f32 %v850, %v859
    %v861 = vmul.f32 %v851, %v859
    %864 = vrot.lane.b32.xlu0 %v860, 127
    %v865 = vpop.permute.xlu0 %864
    %866 = vrot.lane.b32.xlu0 %v861, 127
    %v867 = vpop.permute.xlu0 %866
    %v870 = vadd.f32 %v856, %v865
    %v871 = vadd.f32 %v857, %v867
    %s872 = sld [smem:[#allocation4 + $0x11]]
    %v873 = vstv %s872
    %v874 = vmul.f32 %v850, %v873
    %v875 = vmul.f32 %v851, %v873
    %878 = vrot.lane.b32.xlu0 %v874, 126
    %v879 = vpop.permute.xlu0 %878
    %880 = vrot.lane.b32.xlu0 %v875, 126
    %v881 = vpop.permute.xlu0 %880
    %v884 = vadd.f32 %v870, %v879
    %v885 = vadd.f32 %v871, %v881
    %s886 = scalar_lea.vmem [#allocation3], 80
    %887 = vst.msk [vmem:[%s886] sm:$0xff] %vm326, %v884
    %888 = vst.msk [vmem:[%s886 + $0x8] sm:$0xff] %vm326, %v885
    %s889 = scalar_lea.vmem [#allocation2], 144
    %v890 = vld [vmem:[%s889] sm:$0xff]
    %v891 = vld [vmem:[%s889 + $0x8] sm:$0xff]
    %s892 = sld [smem:[#allocation4 + $0x12]]
    %v893 = vstv %s892
    %v894 = vmul.f32 %v890, %v893
    %v895 = vmul.f32 %v891, %v893
    %v896 = vadd.f32 %v894, 0.0
    %v897 = vadd.f32 %v895, 0.0
    %s898 = sld [smem:[#allocation4 + $0x13]]
    %v899 = vstv %s898
    %v900 = vmul.f32 %v890, %v899
    %v901 = vmul.f32 %v891, %v899
    %904 = vrot.lane.b32.xlu0 %v900, 127
    %v905 = vpop.permute.xlu0 %904
    %906 = vrot.lane.b32.xlu0 %v901, 127
    %v907 = vpop.permute.xlu0 %906
    %v910 = vadd.f32 %v896, %v905
    %v911 = vadd.f32 %v897, %v907
    %s912 = sld [smem:[#allocation4 + $0x14]]
    %v913 = vstv %s912
    %v914 = vmul.f32 %v890, %v913
    %v915 = vmul.f32 %v891, %v913
    %918 = vrot.lane.b32.xlu0 %v914, 126
    %v919 = vpop.permute.xlu0 %918
    %920 = vrot.lane.b32.xlu0 %v915, 126
    %v921 = vpop.permute.xlu0 %920
    %v924 = vadd.f32 %v910, %v919
    %v925 = vadd.f32 %v911, %v921
    %v926 = vld [vmem:[%s889 + $0x1] sm:$0xff]
    %v927 = vld [vmem:[%s889 + $0x9] sm:$0xff]
    %s928 = sld [smem:[#allocation4 + $0x15]]
    %v929 = vstv %s928
    %v930 = vmul.f32 %v926, %v929
    %v931 = vmul.f32 %v927, %v929
    %v932 = vadd.f32 %v924, %v930
    %v933 = vadd.f32 %v925, %v931
    %s934 = sld [smem:[#allocation4 + $0x16]]
    %v935 = vstv %s934
    %v936 = vmul.f32 %v926, %v935
    %v937 = vmul.f32 %v927, %v935
    %940 = vrot.lane.b32.xlu0 %v936, 127
    %v941 = vpop.permute.xlu0 %940
    %942 = vrot.lane.b32.xlu0 %v937, 127
    %v943 = vpop.permute.xlu0 %942
    %v946 = vadd.f32 %v932, %v941
    %v947 = vadd.f32 %v933, %v943
    %s948 = sld [smem:[#allocation4 + $0x17]]
    %v949 = vstv %s948
    %v950 = vmul.f32 %v926, %v949
    %v951 = vmul.f32 %v927, %v949
    %954 = vrot.lane.b32.xlu0 %v950, 126
    %v955 = vpop.permute.xlu0 %954
    %956 = vrot.lane.b32.xlu0 %v951, 126
    %v957 = vpop.permute.xlu0 %956
    %v960 = vadd.f32 %v946, %v955
    %v961 = vadd.f32 %v947, %v957
    %v962 = vld [vmem:[%s889 + $0x2] sm:$0xff]
    %v963 = vld [vmem:[%s889 + $0xa] sm:$0xff]
    %s964 = sld [smem:[#allocation4 + $0x18]]
    %v965 = vstv %s964
    %v966 = vmul.f32 %v962, %v965
    %v967 = vmul.f32 %v963, %v965
    %v968 = vadd.f32 %v960, %v966
    %v969 = vadd.f32 %v961, %v967
    %s970 = sld [smem:[#allocation4 + $0x19]]
    %v971 = vstv %s970
    %v972 = vmul.f32 %v962, %v971
    %v973 = vmul.f32 %v963, %v971
    %976 = vrot.lane.b32.xlu0 %v972, 127
    %v977 = vpop.permute.xlu0 %976
    %978 = vrot.lane.b32.xlu0 %v973, 127
    %v979 = vpop.permute.xlu0 %978
    %v982 = vadd.f32 %v968, %v977
    %v983 = vadd.f32 %v969, %v979
    %s984 = sld [smem:[#allocation4 + $0x1a]]
    %v985 = vstv %s984
    %v986 = vmul.f32 %v962, %v985
    %v987 = vmul.f32 %v963, %v985
    %990 = vrot.lane.b32.xlu0 %v986, 126
    %v991 = vpop.permute.xlu0 %990
    %992 = vrot.lane.b32.xlu0 %v987, 126
    %v993 = vpop.permute.xlu0 %992
    %v996 = vadd.f32 %v982, %v991
    %v997 = vadd.f32 %v983, %v993
    %s998 = scalar_lea.vmem [#allocation3], 96
    %999 = vst.msk [vmem:[%s998] sm:$0xff] %vm326, %v996
    %1000 = vst.msk [vmem:[%s998 + $0x8] sm:$0xff] %vm326, %v997
    %s1001 = scalar_lea.vmem [#allocation2], 168
    %v1002 = vld [vmem:[%s1001] sm:$0xff]
    %v1003 = vld [vmem:[%s1001 + $0x8] sm:$0xff]
    %s1004 = sld [smem:[#allocation4 + $0x1b]]
    %v1005 = vstv %s1004
    %v1006 = vmul.f32 %v1002, %v1005
    %v1007 = vmul.f32 %v1003, %v1005
    %v1008 = vadd.f32 %v1006, 0.0
    %v1009 = vadd.f32 %v1007, 0.0
    %s1010 = sld [smem:[#allocation4 + $0x1c]]
    %v1011 = vstv %s1010
    %v1012 = vmul.f32 %v1002, %v1011
    %v1013 = vmul.f32 %v1003, %v1011
    %1016 = vrot.lane.b32.xlu0 %v1012, 127
    %v1017 = vpop.permute.xlu0 %1016
    %1018 = vrot.lane.b32.xlu0 %v1013, 127
    %v1019 = vpop.permute.xlu0 %1018
    %v1022 = vadd.f32 %v1008, %v1017
    %v1023 = vadd.f32 %v1009, %v1019
    %s1024 = sld [smem:[#allocation4 + $0x1d]]
    %v1025 = vstv %s1024
    %v1026 = vmul.f32 %v1002, %v1025
    %v1027 = vmul.f32 %v1003, %v1025
    %1030 = vrot.lane.b32.xlu0 %v1026, 126
    %v1031 = vpop.permute.xlu0 %1030
    %1032 = vrot.lane.b32.xlu0 %v1027, 126
    %v1033 = vpop.permute.xlu0 %1032
    %v1036 = vadd.f32 %v1022, %v1031
    %v1037 = vadd.f32 %v1023, %v1033
    %v1038 = vld [vmem:[%s1001 + $0x1] sm:$0xff]
    %v1039 = vld [vmem:[%s1001 + $0x9] sm:$0xff]
    %s1040 = sld [smem:[#allocation4 + $0x1e]]
    %v1041 = vstv %s1040
    %v1042 = vmul.f32 %v1038, %v1041
    %v1043 = vmul.f32 %v1039, %v1041
    %v1044 = vadd.f32 %v1036, %v1042
    %v1045 = vadd.f32 %v1037, %v1043
    %s1046 = sld [smem:[#allocation4 + $0x1f]]
    %v1047 = vstv %s1046
    %v1048 = vmul.f32 %v1038, %v1047
    %v1049 = vmul.f32 %v1039, %v1047
    %1052 = vrot.lane.b32.xlu0 %v1048, 127
    %v1053 = vpop.permute.xlu0 %1052
    %1054 = vrot.lane.b32.xlu0 %v1049, 127
    %v1055 = vpop.permute.xlu0 %1054
    %v1058 = vadd.f32 %v1044, %v1053
    %v1059 = vadd.f32 %v1045, %v1055
    %s1060 = sld [smem:[#allocation4 + $0x20]]
    %v1061 = vstv %s1060
    %v1062 = vmul.f32 %v1038, %v1061
    %v1063 = vmul.f32 %v1039, %v1061
    %1066 = vrot.lane.b32.xlu0 %v1062, 126
    %v1067 = vpop.permute.xlu0 %1066
    %1068 = vrot.lane.b32.xlu0 %v1063, 126
    %v1069 = vpop.permute.xlu0 %1068
    %v1072 = vadd.f32 %v1058, %v1067
    %v1073 = vadd.f32 %v1059, %v1069
    %v1074 = vld [vmem:[%s1001 + $0x2] sm:$0xff]
    %v1075 = vld [vmem:[%s1001 + $0xa] sm:$0xff]
    %s1076 = sld [smem:[#allocation4 + $0x21]]
    %v1077 = vstv %s1076
    %v1078 = vmul.f32 %v1074, %v1077
    %v1079 = vmul.f32 %v1075, %v1077
    %v1080 = vadd.f32 %v1072, %v1078
    %v1081 = vadd.f32 %v1073, %v1079
    %s1082 = sld [smem:[#allocation4 + $0x22]]
    %v1083 = vstv %s1082
    %v1084 = vmul.f32 %v1074, %v1083
    %v1085 = vmul.f32 %v1075, %v1083
    %1088 = vrot.lane.b32.xlu0 %v1084, 127
    %v1089 = vpop.permute.xlu0 %1088
    %1090 = vrot.lane.b32.xlu0 %v1085, 127
    %v1091 = vpop.permute.xlu0 %1090
    %v1094 = vadd.f32 %v1080, %v1089
    %v1095 = vadd.f32 %v1081, %v1091
    %s1096 = sld [smem:[#allocation4 + $0x23]]
    %v1097 = vstv %s1096
    %v1098 = vmul.f32 %v1074, %v1097
    %v1099 = vmul.f32 %v1075, %v1097
    %1102 = vrot.lane.b32.xlu0 %v1098, 126
    %v1103 = vpop.permute.xlu0 %1102
    %1104 = vrot.lane.b32.xlu0 %v1099, 126
    %v1105 = vpop.permute.xlu0 %1104
    %v1108 = vadd.f32 %v1094, %v1103
    %v1109 = vadd.f32 %v1095, %v1105
    %s1110 = scalar_lea.vmem [#allocation3], 112
    %1111 = vst.msk [vmem:[%s1110] sm:$0xff] %vm326, %v1108
    %1112 = vst.msk [vmem:[%s1110 + $0x8] sm:$0xff] %vm326, %v1109
    %v1113 = vld [vmem:[#allocation8] sm:$0xff]
    %v1114 = vld [vmem:[#allocation3] sm:$0xff]
    %v1115 = vld [vmem:[#allocation3 + $0x8] sm:$0xff]
    %v1116 = vld [vmem:[#allocation3 + $0x10] sm:$0xff]
    %v1117 = vld [vmem:[#allocation3 + $0x18] sm:$0xff]
    %v1118 = vld [vmem:[#allocation3 + $0x20] sm:$0xff]
    %v1119 = vld [vmem:[#allocation3 + $0x28] sm:$0xff]
    %v1120 = vld [vmem:[#allocation3 + $0x30] sm:$0xff]
    %v1121 = vld [vmem:[#allocation3 + $0x38] sm:$0xff]
    %v1122 = vcombine.low %v1114, %v1118
    %v1123 = vcombine.high %v1114, %v1118
    %v1125 = vunpack.c.l.s4 1983009808
    %v1126 = vunpack.c.0.s8 %v1125
    %v1127 = vlaneseq
    %v1128 = vshrl.u32 %v1127, 7
    %v1129 = vsub.s32 %v1126, %v1128
    %v1130 = vrot.slane %v1122, %v1129
    %v1132 = vunpack.c.l.s4 1983009808
    %v1133 = vunpack.c.0.s8 %v1132
    %v1134 = vlaneseq
    %v1135 = vshrl.u32 %v1134, 7
    %v1136 = vsub.s32 %v1133, %v1135
    %v1137 = vrot.slane %v1123, %v1136
    %v1138 = vcombine.low %v1116, %v1120
    %v1139 = vcombine.high %v1116, %v1120
    %v1141 = vunpack.c.l.s4 1983009808
    %v1142 = vunpack.c.0.s8 %v1141
    %v1143 = vlaneseq
    %v1144 = vshrl.u32 %v1143, 7
    %v1145 = vsub.s32 %v1142, %v1144
    %v1146 = vrot.slane %v1138, %v1145
    %v1148 = vunpack.c.l.s4 1983009808
    %v1149 = vunpack.c.0.s8 %v1148
    %v1150 = vlaneseq
    %v1151 = vshrl.u32 %v1150, 7
    %v1152 = vsub.s32 %v1149, %v1151
    %v1153 = vrot.slane %v1139, %v1152
    %v1154 = vcombine.low %v1130, %v1146
    %v1155 = vcombine.high %v1130, %v1146
    %v1157 = vunpack.c.l.s4 1934713408
    %v1158 = vunpack.c.0.s8 %v1157
    %v1159 = vlaneseq
    %v1160 = vshrl.u32 %v1159, 7
    %v1161 = vsub.s32 %v1158, %v1160
    %v1162 = vrot.slane %v1154, %v1161
    %v1164 = vunpack.c.l.s4 1934713408
    %v1165 = vunpack.c.0.s8 %v1164
    %v1166 = vlaneseq
    %v1167 = vshrl.u32 %v1166, 7
    %v1168 = vsub.s32 %v1165, %v1167
    %v1169 = vrot.slane %v1155, %v1168
    %v1170 = vcombine.low %v1137, %v1153
    %v1171 = vcombine.high %v1137, %v1153
    %v1173 = vunpack.c.l.s4 1934713408
    %v1174 = vunpack.c.0.s8 %v1173
    %v1175 = vlaneseq
    %v1176 = vshrl.u32 %v1175, 7
    %v1177 = vsub.s32 %v1174, %v1176
    %v1178 = vrot.slane %v1170, %v1177
    %v1180 = vunpack.c.l.s4 1934713408
    %v1181 = vunpack.c.0.s8 %v1180
    %v1182 = vlaneseq
    %v1183 = vshrl.u32 %v1182, 7
    %v1184 = vsub.s32 %v1181, %v1183
    %v1185 = vrot.slane %v1171, %v1184
    %v1186 = vcombine.high %v1162, 0.0
    %v1187 = vcombine.high %v1169, 0.0
    %v1188 = vcombine.high %v1178, 0.0
    %v1189 = vcombine.high %v1185, 0.0
    %v1190 = vcombine.low %v1115, %v1119
    %v1191 = vcombine.high %v1115, %v1119
    %v1193 = vunpack.c.l.s4 1983009808
    %v1194 = vunpack.c.0.s8 %v1193
    %v1195 = vlaneseq
    %v1196 = vshrl.u32 %v1195, 7
    %v1197 = vsub.s32 %v1194, %v1196
    %v1198 = vrot.slane %v1190, %v1197
    %v1200 = vunpack.c.l.s4 1983009808
    %v1201 = vunpack.c.0.s8 %v1200
    %v1202 = vlaneseq
    %v1203 = vshrl.u32 %v1202, 7
    %v1204 = vsub.s32 %v1201, %v1203
    %v1205 = vrot.slane %v1191, %v1204
    %v1206 = vcombine.low %v1117, %v1121
    %v1207 = vcombine.high %v1117, %v1121
    %v1209 = vunpack.c.l.s4 1983009808
    %v1210 = vunpack.c.0.s8 %v1209
    %v1211 = vlaneseq
    %v1212 = vshrl.u32 %v1211, 7
    %v1213 = vsub.s32 %v1210, %v1212
    %v1214 = vrot.slane %v1206, %v1213
    %v1216 = vunpack.c.l.s4 1983009808
    %v1217 = vunpack.c.0.s8 %v1216
    %v1218 = vlaneseq
    %v1219 = vshrl.u32 %v1218, 7
    %v1220 = vsub.s32 %v1217, %v1219
    %v1221 = vrot.slane %v1207, %v1220
    %v1222 = vcombine.low %v1198, %v1214
    %v1223 = vcombine.high %v1198, %v1214
    %v1225 = vunpack.c.l.s4 1934713408
    %v1226 = vunpack.c.0.s8 %v1225
    %v1227 = vlaneseq
    %v1228 = vshrl.u32 %v1227, 7
    %v1229 = vsub.s32 %v1226, %v1228
    %v1230 = vrot.slane %v1222, %v1229
    %v1232 = vunpack.c.l.s4 1934713408
    %v1233 = vunpack.c.0.s8 %v1232
    %v1234 = vlaneseq
    %v1235 = vshrl.u32 %v1234, 7
    %v1236 = vsub.s32 %v1233, %v1235
    %v1237 = vrot.slane %v1223, %v1236
    %v1238 = vcombine.low %v1205, %v1221
    %v1239 = vcombine.high %v1205, %v1221
    %v1241 = vunpack.c.l.s4 1934713408
    %v1242 = vunpack.c.0.s8 %v1241
    %v1243 = vlaneseq
    %v1244 = vshrl.u32 %v1243, 7
    %v1245 = vsub.s32 %v1242, %v1244
    %v1246 = vrot.slane %v1238, %v1245
    %v1248 = vunpack.c.l.s4 1934713408
    %v1249 = vunpack.c.0.s8 %v1248
    %v1250 = vlaneseq
    %v1251 = vshrl.u32 %v1250, 7
    %v1252 = vsub.s32 %v1249, %v1251
    %v1253 = vrot.slane %v1239, %v1252
    %v1254 = vcombine.high %v1230, 0.0
    %v1255 = vcombine.high %v1237, 0.0
    %v1256 = vcombine.high %v1246, 0.0
    %v1257 = vcombine.high %v1253, 0.0
    %1259 = vrot.lane.b32.xlu0 %v1186, 16
    %v1260 = vpop.permute.xlu0 %1259
    %1263 = vrot.lane.b32.xlu0 %v1169, 32
    %v1264 = vpop.permute.xlu0 %1263
    %1267 = vrot.lane.b32.xlu0 %v1187, 48
    %v1268 = vpop.permute.xlu0 %1267
    %1271 = vrot.lane.b32.xlu0 %v1178, 64
    %v1272 = vpop.permute.xlu0 %1271
    %1275 = vrot.lane.b32.xlu0 %v1188, 80
    %v1276 = vpop.permute.xlu0 %1275
    %1279 = vrot.lane.b32.xlu0 %v1185, 96
    %v1280 = vpop.permute.xlu0 %1279
    %1283 = vrot.lane.b32.xlu0 %v1189, 112
    %v1284 = vpop.permute.xlu0 %1283
    %1287 = vrot.lane.b32.xlu0 %v1254, 16
    %v1288 = vpop.permute.xlu0 %1287
    %1291 = vrot.lane.b32.xlu0 %v1237, 32
    %v1292 = vpop.permute.xlu0 %1291
    %1295 = vrot.lane.b32.xlu0 %v1255, 48
    %v1296 = vpop.permute.xlu0 %1295
    %1299 = vrot.lane.b32.xlu0 %v1246, 64
    %v1300 = vpop.permute.xlu0 %1299
    %1303 = vrot.lane.b32.xlu0 %v1256, 80
    %v1304 = vpop.permute.xlu0 %1303
    %1307 = vrot.lane.b32.xlu0 %v1253, 96
    %v1308 = vpop.permute.xlu0 %1307
    %1311 = vrot.lane.b32.xlu0 %v1257, 112
    %v1312 = vpop.permute.xlu0 %1311
    %v1314 = vsel %vm326, %v1162, %v1260
    %vm1315 = vcmask 261120
    %v1316 = vsel %vm1315, %v1314, %v1264
    %vm1317 = vcmask 392192
    %v1318 = vsel %vm1317, %v1316, %v1268
    %vm1319 = vcmask 523264
    %v1320 = vsel %vm1319, %v1318, %v1272
    %vm1321 = vcmask 654336
    %v1322 = vsel %vm1321, %v1320, %v1276
    %vm1323 = vcmask 785408
    %v1324 = vsel %vm1323, %v1322, %v1280
    %vm1325 = vcmask 916480
    %v1326 = vsel %vm1325, %v1324, %v1284
    %v1327 = vsel %vm326, %v1230, %v1288
    %v1328 = vsel %vm1315, %v1327, %v1292
    %v1329 = vsel %vm1317, %v1328, %v1296
    %v1330 = vsel %vm1319, %v1329, %v1300
    %v1331 = vsel %vm1321, %v1330, %v1304
    %v1332 = vsel %vm1323, %v1331, %v1308
    %v1333 = vsel %vm1325, %v1332, %v1312
    %vm1334 = vcmask 31744
    %v1336 = vsel %vm1334, %v1113, 0
    %vm1338 = vcmask 1043456
    %v1340 = vsel %vm1338, %v1326, 0
    %v1343 = vsel %vm1338, %v1333, 0
    %1345 = vmatprep.subr.mxu0 %v1343
    %1346 = vmatpush1.msra.mxu0 %v1340
    %1347 = vmatprep.subr.mxu0 0.0
    %1348 = vmatpush1.msra.mxu0 0.0
    %1349 = vmatprep.subr.mxu0 0.0
    %1350 = vmatpush1.msra.mxu0 0.0
    %1351 = vmatprep.subr.mxu0 0.0
    %1352 = vmatpush1.msra.mxu0 0.0
    %1353 = vmatprep.subr.mxu0 0.0
    %1354 = vmatpush1.msra.mxu0 0.0
    %1355 = vmatprep.subr.mxu0 0.0
    %1356 = vmatpush1.msra.mxu0 0.0
    %1357 = vmatprep.subr.mxu0 0.0
    %1358 = vmatpush1.msra.mxu0 0.0
    %1359 = vmatprep.subr.mxu0 0.0
    %1360 = vmatpush1.msra.mxu0 0.0
    %1361 = vmatprep.subr.mxu0 0.0
    %1362 = vmatpush1.msra.mxu0 0.0
    %1363 = vmatprep.subr.mxu0 0.0
    %1364 = vmatpush1.msra.mxu0 0.0
    %1365 = vmatprep.subr.mxu0 0.0
    %1366 = vmatpush1.msra.mxu0 0.0
    %1367 = vmatprep.subr.mxu0 0.0
    %1368 = vmatpush1.msra.mxu0 0.0
    %1369 = vmatprep.subr.mxu0 0.0
    %1370 = vmatpush1.msra.mxu0 0.0
    %1371 = vmatprep.subr.mxu0 0.0
    %1372 = vmatpush1.msra.mxu0 0.0
    %1373 = vmatprep.subr.mxu0 0.0
    %1374 = vmatpush1.msra.mxu0 0.0
    %1375 = vmatprep.subr.mxu0 0.0
    %1376 = vmatpush1.msra.mxu0 0.0
    %1377 = vmatprep.subr.mxu0 0.0
    %1378 = vmatpush1.msra.mxu0 0.0
    %1379 = vmatprep.subr.mxu0 0.0
    %1380 = vmatpush1.msra.mxu0 0.0
    %1381 = vmatprep.subr.mxu0 0.0
    %1382 = vmatpush1.msra.mxu0 0.0
    %1383 = vmatprep.subr.mxu0 0.0
    %1384 = vmatpush1.msra.mxu0 0.0
    %1385 = vmatprep.subr.mxu0 0.0
    %1386 = vmatpush1.msra.mxu0 0.0
    %1387 = vmatprep.subr.mxu0 0.0
    %1388 = vmatpush1.msra.mxu0 0.0
    %1389 = vmatprep.subr.mxu0 0.0
    %1390 = vmatpush1.msra.mxu0 0.0
    %1391 = vmatprep.subr.mxu0 0.0
    %1392 = vmatpush1.msra.mxu0 0.0
    %1393 = vmatprep.subr.mxu0 0.0
    %1394 = vmatpush1.msra.mxu0 0.0
    %1395 = vmatprep.subr.mxu0 0.0
    %1396 = vmatpush1.msra.mxu0 0.0
    %1397 = vmatprep.subr.mxu0 0.0
    %1398 = vmatpush1.msra.mxu0 0.0
    %1399 = vmatprep.subr.mxu0 0.0
    %1400 = vmatpush1.msra.mxu0 0.0
    %1401 = vmatprep.subr.mxu0 0.0
    %1402 = vmatpush1.msra.mxu0 0.0
    %1403 = vmatprep.subr.mxu0 0.0
    %1404 = vmatpush1.msra.mxu0 0.0
    %1405 = vmatprep.subr.mxu0 0.0
    %1406 = vmatpush1.msra.mxu0 0.0
    %1407 = vmatprep.subr.mxu0 0.0
    %1408 = vmatpush1.msra.mxu0 0.0
    %1409 = vmatprep.mubr.f32.mxu0 0.0
    %1410 = vmatmul.mubr.f32.gmra.mrb[0].mxu0 %v1336
    %v1411 = vpop.f32.mrb[0].mxu0
    %v1412 = vadd.f32 0.0, %v1411
    %v1413 = vpop.f32.mrb[0].mxu0
    %v1414 = vadd.f32 0.0, %v1413
    %1415 = vdwg.mxu0
    %1416 = vst [vmem:[#allocation11] sm:$0xff] %v1412
    %1417 = vst [vmem:[#allocation11 + $0x8] sm:$0xff] %v1414
    %v1418 = vld [vmem:[%s774] sm:$0xff]
    %v1419 = vld [vmem:[%s774 + $0x8] sm:$0xff]
    %v1420 = vld [vmem:[%s774 + $0x10] sm:$0xff]
    %v1421 = vld [vmem:[%s774 + $0x18] sm:$0xff]
    %v1422 = vld [vmem:[%s774 + $0x20] sm:$0xff]
    %v1423 = vld [vmem:[%s774 + $0x28] sm:$0xff]
    %v1424 = vld [vmem:[%s774 + $0x30] sm:$0xff]
    %v1425 = vld [vmem:[%s774 + $0x38] sm:$0xff]
    %v1426 = vcombine.low %v1418, %v1422
    %v1427 = vcombine.high %v1418, %v1422
    %v1429 = vunpack.c.l.s4 1983009808
    %v1430 = vunpack.c.0.s8 %v1429
    %v1431 = vlaneseq
    %v1432 = vshrl.u32 %v1431, 7
    %v1433 = vsub.s32 %v1430, %v1432
    %v1434 = vrot.slane %v1426, %v1433
    %v1436 = vunpack.c.l.s4 1983009808
    %v1437 = vunpack.c.0.s8 %v1436
    %v1438 = vlaneseq
    %v1439 = vshrl.u32 %v1438, 7
    %v1440 = vsub.s32 %v1437, %v1439
    %v1441 = vrot.slane %v1427, %v1440
    %v1442 = vcombine.low %v1420, %v1424
    %v1443 = vcombine.high %v1420, %v1424
    %v1445 = vunpack.c.l.s4 1983009808
    %v1446 = vunpack.c.0.s8 %v1445
    %v1447 = vlaneseq
    %v1448 = vshrl.u32 %v1447, 7
    %v1449 = vsub.s32 %v1446, %v1448
    %v1450 = vrot.slane %v1442, %v1449
    %v1452 = vunpack.c.l.s4 1983009808
    %v1453 = vunpack.c.0.s8 %v1452
    %v1454 = vlaneseq
    %v1455 = vshrl.u32 %v1454, 7
    %v1456 = vsub.s32 %v1453, %v1455
    %v1457 = vrot.slane %v1443, %v1456
    %v1458 = vcombine.low %v1434, %v1450
    %v1459 = vcombine.high %v1434, %v1450
    %v1461 = vunpack.c.l.s4 1934713408
    %v1462 = vunpack.c.0.s8 %v1461
    %v1463 = vlaneseq
    %v1464 = vshrl.u32 %v1463, 7
    %v1465 = vsub.s32 %v1462, %v1464
    %v1466 = vrot.slane %v1458, %v1465
    %v1468 = vunpack.c.l.s4 1934713408
    %v1469 = vunpack.c.0.s8 %v1468
    %v1470 = vlaneseq
    %v1471 = vshrl.u32 %v1470, 7
    %v1472 = vsub.s32 %v1469, %v1471
    %v1473 = vrot.slane %v1459, %v1472
    %v1474 = vcombine.low %v1441, %v1457
    %v1475 = vcombine.high %v1441, %v1457
    %v1477 = vunpack.c.l.s4 1934713408
    %v1478 = vunpack.c.0.s8 %v1477
    %v1479 = vlaneseq
    %v1480 = vshrl.u32 %v1479, 7
    %v1481 = vsub.s32 %v1478, %v1480
    %v1482 = vrot.slane %v1474, %v1481
    %v1484 = vunpack.c.l.s4 1934713408
    %v1485 = vunpack.c.0.s8 %v1484
    %v1486 = vlaneseq
    %v1487 = vshrl.u32 %v1486, 7
    %v1488 = vsub.s32 %v1485, %v1487
    %v1489 = vrot.slane %v1475, %v1488
    %v1490 = vcombine.high %v1466, 0.0
    %v1491 = vcombine.high %v1473, 0.0
    %v1492 = vcombine.high %v1482, 0.0
    %v1493 = vcombine.high %v1489, 0.0
    %v1494 = vcombine.low %v1419, %v1423
    %v1495 = vcombine.high %v1419, %v1423
    %v1497 = vunpack.c.l.s4 1983009808
    %v1498 = vunpack.c.0.s8 %v1497
    %v1499 = vlaneseq
    %v1500 = vshrl.u32 %v1499, 7
    %v1501 = vsub.s32 %v1498, %v1500
    %v1502 = vrot.slane %v1494, %v1501
    %v1504 = vunpack.c.l.s4 1983009808
    %v1505 = vunpack.c.0.s8 %v1504
    %v1506 = vlaneseq
    %v1507 = vshrl.u32 %v1506, 7
    %v1508 = vsub.s32 %v1505, %v1507
    %v1509 = vrot.slane %v1495, %v1508
    %v1510 = vcombine.low %v1421, %v1425
    %v1511 = vcombine.high %v1421, %v1425
    %v1513 = vunpack.c.l.s4 1983009808
    %v1514 = vunpack.c.0.s8 %v1513
    %v1515 = vlaneseq
    %v1516 = vshrl.u32 %v1515, 7
    %v1517 = vsub.s32 %v1514, %v1516
    %v1518 = vrot.slane %v1510, %v1517
    %v1520 = vunpack.c.l.s4 1983009808
    %v1521 = vunpack.c.0.s8 %v1520
    %v1522 = vlaneseq
    %v1523 = vshrl.u32 %v1522, 7
    %v1524 = vsub.s32 %v1521, %v1523
    %v1525 = vrot.slane %v1511, %v1524
    %v1526 = vcombine.low %v1502, %v1518
    %v1527 = vcombine.high %v1502, %v1518
    %v1529 = vunpack.c.l.s4 1934713408
    %v1530 = vunpack.c.0.s8 %v1529
    %v1531 = vlaneseq
    %v1532 = vshrl.u32 %v1531, 7
    %v1533 = vsub.s32 %v1530, %v1532
    %v1534 = vrot.slane %v1526, %v1533
    %v1536 = vunpack.c.l.s4 1934713408
    %v1537 = vunpack.c.0.s8 %v1536
    %v1538 = vlaneseq
    %v1539 = vshrl.u32 %v1538, 7
    %v1540 = vsub.s32 %v1537, %v1539
    %v1541 = vrot.slane %v1527, %v1540
    %v1542 = vcombine.low %v1509, %v1525
    %v1543 = vcombine.high %v1509, %v1525
    %v1545 = vunpack.c.l.s4 1934713408
    %v1546 = vunpack.c.0.s8 %v1545
    %v1547 = vlaneseq
    %v1548 = vshrl.u32 %v1547, 7
    %v1549 = vsub.s32 %v1546, %v1548
    %v1550 = vrot.slane %v1542, %v1549
    %v1552 = vunpack.c.l.s4 1934713408
    %v1553 = vunpack.c.0.s8 %v1552
    %v1554 = vlaneseq
    %v1555 = vshrl.u32 %v1554, 7
    %v1556 = vsub.s32 %v1553, %v1555
    %v1557 = vrot.slane %v1543, %v1556
    %v1558 = vcombine.high %v1534, 0.0
    %v1559 = vcombine.high %v1541, 0.0
    %v1560 = vcombine.high %v1550, 0.0
    %v1561 = vcombine.high %v1557, 0.0
    %1563 = vrot.lane.b32.xlu0 %v1490, 16
    %v1564 = vpop.permute.xlu0 %1563
    %1567 = vrot.lane.b32.xlu0 %v1473, 32
    %v1568 = vpop.permute.xlu0 %1567
    %1571 = vrot.lane.b32.xlu0 %v1491, 48
    %v1572 = vpop.permute.xlu0 %1571
    %1575 = vrot.lane.b32.xlu0 %v1482, 64
    %v1576 = vpop.permute.xlu0 %1575
    %1579 = vrot.lane.b32.xlu0 %v1492, 80
    %v1580 = vpop.permute.xlu0 %1579
    %1583 = vrot.lane.b32.xlu0 %v1489, 96
    %v1584 = vpop.permute.xlu0 %1583
    %1587 = vrot.lane.b32.xlu0 %v1493, 112
    %v1588 = vpop.permute.xlu0 %1587
    %1591 = vrot.lane.b32.xlu0 %v1558, 16
    %v1592 = vpop.permute.xlu0 %1591
    %1595 = vrot.lane.b32.xlu0 %v1541, 32
    %v1596 = vpop.permute.xlu0 %1595
    %1599 = vrot.lane.b32.xlu0 %v1559, 48
    %v1600 = vpop.permute.xlu0 %1599
    %1603 = vrot.lane.b32.xlu0 %v1550, 64
    %v1604 = vpop.permute.xlu0 %1603
    %1607 = vrot.lane.b32.xlu0 %v1560, 80
    %v1608 = vpop.permute.xlu0 %1607
    %1611 = vrot.lane.b32.xlu0 %v1557, 96
    %v1612 = vpop.permute.xlu0 %1611
    %1615 = vrot.lane.b32.xlu0 %v1561, 112
    %v1616 = vpop.permute.xlu0 %1615
    %v1618 = vsel %vm326, %v1466, %v1564
    %v1619 = vsel %vm1315, %v1618, %v1568
    %v1620 = vsel %vm1317, %v1619, %v1572
    %v1621 = vsel %vm1319, %v1620, %v1576
    %v1622 = vsel %vm1321, %v1621, %v1580
    %v1623 = vsel %vm1323, %v1622, %v1584
    %v1624 = vsel %vm1325, %v1623, %v1588
    %v1625 = vsel %vm326, %v1534, %v1592
    %v1626 = vsel %vm1315, %v1625, %v1596
    %v1627 = vsel %vm1317, %v1626, %v1600
    %v1628 = vsel %vm1319, %v1627, %v1604
    %v1629 = vsel %vm1321, %v1628, %v1608
    %v1630 = vsel %vm1323, %v1629, %v1612
    %v1631 = vsel %vm1325, %v1630, %v1616
    %v1633 = vsel %vm1338, %v1624, 0
    %v1636 = vsel %vm1338, %v1631, 0
    %1638 = vmatprep.subr.mxu0 %v1636
    %1639 = vmatpush1.msra.mxu0 %v1633
    %1640 = vmatprep.subr.mxu0 0.0
    %1641 = vmatpush1.msra.mxu0 0.0
    %1642 = vmatprep.subr.mxu0 0.0
    %1643 = vmatpush1.msra.mxu0 0.0
    %1644 = vmatprep.subr.mxu0 0.0
    %1645 = vmatpush1.msra.mxu0 0.0
    %1646 = vmatprep.subr.mxu0 0.0
    %1647 = vmatpush1.msra.mxu0 0.0
    %1648 = vmatprep.subr.mxu0 0.0
    %1649 = vmatpush1.msra.mxu0 0.0
    %1650 = vmatprep.subr.mxu0 0.0
    %1651 = vmatpush1.msra.mxu0 0.0
    %1652 = vmatprep.subr.mxu0 0.0
    %1653 = vmatpush1.msra.mxu0 0.0
    %1654 = vmatprep.subr.mxu0 0.0
    %1655 = vmatpush1.msra.mxu0 0.0
    %1656 = vmatprep.subr.mxu0 0.0
    %1657 = vmatpush1.msra.mxu0 0.0
    %1658 = vmatprep.subr.mxu0 0.0
    %1659 = vmatpush1.msra.mxu0 0.0
    %1660 = vmatprep.subr.mxu0 0.0
    %1661 = vmatpush1.msra.mxu0 0.0
    %1662 = vmatprep.subr.mxu0 0.0
    %1663 = vmatpush1.msra.mxu0 0.0
    %1664 = vmatprep.subr.mxu0 0.0
    %1665 = vmatpush1.msra.mxu0 0.0
    %1666 = vmatprep.subr.mxu0 0.0
    %1667 = vmatpush1.msra.mxu0 0.0
    %1668 = vmatprep.subr.mxu0 0.0
    %1669 = vmatpush1.msra.mxu0 0.0
    %1670 = vmatprep.subr.mxu0 0.0
    %1671 = vmatpush1.msra.mxu0 0.0
    %1672 = vmatprep.subr.mxu0 0.0
    %1673 = vmatpush1.msra.mxu0 0.0
    %1674 = vmatprep.subr.mxu0 0.0
    %1675 = vmatpush1.msra.mxu0 0.0
    %1676 = vmatprep.subr.mxu0 0.0
    %1677 = vmatpush1.msra.mxu0 0.0
    %1678 = vmatprep.subr.mxu0 0.0
    %1679 = vmatpush1.msra.mxu0 0.0
    %1680 = vmatprep.subr.mxu0 0.0
    %1681 = vmatpush1.msra.mxu0 0.0
    %1682 = vmatprep.subr.mxu0 0.0
    %1683 = vmatpush1.msra.mxu0 0.0
    %1684 = vmatprep.subr.mxu0 0.0
    %1685 = vmatpush1.msra.mxu0 0.0
    %1686 = vmatprep.subr.mxu0 0.0
    %1687 = vmatpush1.msra.mxu0 0.0
    %1688 = vmatprep.subr.mxu0 0.0
    %1689 = vmatpush1.msra.mxu0 0.0
    %1690 = vmatprep.subr.mxu0 0.0
    %1691 = vmatpush1.msra.mxu0 0.0
    %1692 = vmatprep.subr.mxu0 0.0
    %1693 = vmatpush1.msra.mxu0 0.0
    %1694 = vmatprep.subr.mxu0 0.0
    %1695 = vmatpush1.msra.mxu0 0.0
    %1696 = vmatprep.subr.mxu0 0.0
    %1697 = vmatpush1.msra.mxu0 0.0
    %1698 = vmatprep.subr.mxu0 0.0
    %1699 = vmatpush1.msra.mxu0 0.0
    %1700 = vmatprep.subr.mxu0 0.0
    %1701 = vmatpush1.msra.mxu0 0.0
    %1702 = vmatprep.mubr.f32.mxu0 0.0
    %1703 = vmatmul.mubr.f32.gmra.mrb[0].mxu0 %v1336
    %v1704 = vpop.f32.mrb[0].mxu0
    %v1705 = vadd.f32 0.0, %v1704
    %v1706 = vpop.f32.mrb[0].mxu0
    %v1707 = vadd.f32 0.0, %v1706
    %1708 = vdwg.mxu0
    %s1709 = scalar_lea.vmem [#allocation11], 16
    %1710 = vst [vmem:[%s1709] sm:$0xff] %v1705
    %1711 = vst [vmem:[%s1709 + $0x8] sm:$0xff] %v1707
    // Predicated region
    $region26: #{tpu_custom_call.1} parent=1 // pred_check
      _
    $region27: #{tpu_custom_call.1} parent=1 // pred_check_branch
      %1713 = sbr.rel (0) target = $region29
    $region28: #{tpu_custom_call.1} parent=1 // pred_region
      %s1715 = ssub.s32 512, 512
      %1716 = vsyncadd [#allocation6], %s1715
      %s1717 = sshll.u32 [#allocation11], 4
      %s1718 = int_to_ptr.vmem [resolvable:$true] %s1717
      %1723 = dma.vmem_to_hbm [thread:$0]  %s1718, 512, %s3, [#allocation6], 256, 256, 16
    $region29: #{tpu_custom_call.1} parent=1 // pred_fallthru
      _
    // Predicated region
    $region30: #{tpu_custom_call.1} parent=1 // pred_check
      _
    $region31: #{tpu_custom_call.1} parent=1 // pred_check_branch
      %1725 = sbr.rel (0) target = $region33
    $region32: #{tpu_custom_call.1} parent=1 // pred_region
      %1726 = dma.done [#allocation6], 512
    $region33: #{tpu_custom_call.1} parent=1 // pred_fallthru
      _
    %1727 = vsyncpa [#allocation5], 1
    %1728 = vsyncpa [#allocation10], 1
    %1729 = vsyncpa [#allocation6], 1
    %1730 = vsyncpa [#allocation7], 1

</llo_original>
